<compile_context>
chip_gen: v6e
topology: v6e:2x2x1
jax: 0.10.0
libtpu: 0.0.40
codegen_flags: <defaults>
</compile_context>

<pallas_src>
import jax
import jax.numpy as jnp
from jax.experimental import pallas as pl
from jax.experimental.pallas import tpu as pltpu

IN_FEATURES = 768
HIDDEN1 = 512
HIDDEN2 = 128
OUT_FEATURES = 3
OUT_PAD = 128          # lane-dense output width (logits padded with zero cols)

TM_MAX = 1024          # max batch-tile rows (bf16 x => ~3 MiB double-buffered)


def _round_up(x, m):
    return ((x + m - 1) // m) * m


def mlp_kernel(x_ref, w1_ref, b1_ref, w2_ref, b2_ref, w3_ref, b3_ref, o_ref):
    # x / weights are bf16 -> single-pass MXU matmuls; accumulate in f32 and do
    # bias-add + ReLU in f32 on the VPU, re-casting activations to bf16
    # between layers.
    h = jnp.dot(x_ref[...], w1_ref[...], preferred_element_type=jnp.float32)
    h = jnp.maximum(h + b1_ref[...], 0.0)
    h = jnp.dot(h.astype(jnp.bfloat16), w2_ref[...],
                preferred_element_type=jnp.float32)
    h = jnp.maximum(h + b2_ref[...], 0.0)
    h = jnp.dot(h.astype(jnp.bfloat16), w3_ref[...],
                preferred_element_type=jnp.float32)
    o_ref[...] = (h + b3_ref[...]).astype(o_ref.dtype)


def mlp_classifier_forward(x, params):
    """x: (B, 768) f32; params = (w1(768,512), b1(1,512), w2(512,128),
    b2(1,128), w3(128,3), b3(1,3)) all f32; returns (B, 3) f32 logits."""
    w1, b1, w2, b2, w3, b3 = params
    B = x.shape[0]

    # bf16 activations/weights (f32 accumulation inside the kernel).
    xb = x.astype(jnp.bfloat16)
    w1b = w1.astype(jnp.bfloat16)
    w2b = w2.astype(jnp.bfloat16)
    # Lane-dense output: pad layer-3 to 128 zero columns (sliced off below).
    w3b = jnp.zeros((HIDDEN2, OUT_PAD), jnp.bfloat16).at[:, :OUT_FEATURES].set(
        w3.astype(jnp.bfloat16))
    b3p = jnp.zeros((1, OUT_PAD), jnp.float32).at[:, :OUT_FEATURES].set(b3)

    # Batch tile: multiple of 8 rows; aim for >=2 grid steps (v7x megacore),
    # capped at TM_MAX.  No padding of x: last block is ragged and masked.
    tm = max(8, min(TM_MAX, _round_up(pl.cdiv(B, 2), 8)))
    grid = (pl.cdiv(B, tm),)

    flops = 2 * B * (IN_FEATURES * HIDDEN1
                     + HIDDEN1 * HIDDEN2
                     + HIDDEN2 * OUT_PAD)
    bytes_accessed = (
        2 * B * IN_FEATURES                                   # x (bf16)
        + 4 * B * OUT_PAD                                     # logits (f32)
        + 2 * (IN_FEATURES * HIDDEN1 + HIDDEN1 * HIDDEN2
               + HIDDEN2 * OUT_PAD)                           # weights (bf16)
        + 4 * (HIDDEN1 + HIDDEN2 + OUT_PAD))                  # biases (f32)

    resident = pl.Buffered(1)   # constant-index weight blocks: one VMEM copy

    out = pl.pallas_call(
        mlp_kernel,
        out_shape=jax.ShapeDtypeStruct((B, OUT_PAD), jnp.float32),
        grid_spec=pltpu.PrefetchScalarGridSpec(
            num_scalar_prefetch=0,
            grid=grid,
            in_specs=[
                # x: tiled along batch -> double-buffered DMA overlaps compute.
                pl.BlockSpec((tm, IN_FEATURES), lambda i: (i, 0)),
                # Weights / biases: constant block index, single buffer.
                pl.BlockSpec((IN_FEATURES, HIDDEN1), lambda i: (0, 0),
                             pipeline_mode=resident),
                pl.BlockSpec((1, HIDDEN1), lambda i: (0, 0),
                             pipeline_mode=resident),
                pl.BlockSpec((HIDDEN1, HIDDEN2), lambda i: (0, 0),
                             pipeline_mode=resident),
                pl.BlockSpec((1, HIDDEN2), lambda i: (0, 0),
                             pipeline_mode=resident),
                pl.BlockSpec((HIDDEN2, OUT_PAD), lambda i: (0, 0),
                             pipeline_mode=resident),
                pl.BlockSpec((1, OUT_PAD), lambda i: (0, 0),
                             pipeline_mode=resident),
            ],
            out_specs=pl.BlockSpec((tm, OUT_PAD), lambda i: (i, 0)),
        ),
        compiler_params=pltpu.CompilerParams(
            # Batch tiles are independent -> shard across TCs on v7x.
            dimension_semantics=("parallel",),
            vmem_limit_bytes=32 * 1024 * 1024,
        ),
        cost_estimate=pl.CostEstimate(
            flops=flops, transcendentals=0, bytes_accessed=bytes_accessed),
    )(xb, w1b, b1, w2b, b2, w3b, b3p)

    return out[:, :OUT_FEATURES]


def init_params(key):
    """Mirror PyTorch nn.Linear default init: U(-1/sqrt(fan_in), 1/sqrt(fan_in)).
    Weights stored transposed as (in, out) so the kernel computes x @ W + b."""
    keys = jax.random.split(key, 6)

    def layer(kw, kb, fan_in, fan_out):
        bound = 1.0 / (fan_in ** 0.5)
        w_t = jax.random.uniform(kw, (fan_in, fan_out), jnp.float32,
                                 minval=-bound, maxval=bound)
        b = jax.random.uniform(kb, (1, fan_out), jnp.float32,
                               minval=-bound, maxval=bound)
        return w_t, b

    w1, b1 = layer(keys[0], keys[1], IN_FEATURES, HIDDEN1)
    w2, b2 = layer(keys[2], keys[3], HIDDEN1, HIDDEN2)
    w3, b3 = layer(keys[4], keys[5], HIDDEN2, OUT_FEATURES)
    return w1, b1, w2, b2, w3, b3


def reference_forward(x, params):
    w1, b1, w2, b2, w3, b3 = params
    h = jnp.maximum(x @ w1 + b1, 0.0)
    h = jnp.maximum(h @ w2 + b2, 0.0)
    return h @ w3 + b3


if __name__ == "__main__":
    key = jax.random.PRNGKey(0)
    k_x, k_p = jax.random.split(key)
    params = init_params(k_p)

    # batch=8: single-tile path; batch=1000: multi-step grid + ragged last tile.
    for batch in (8, 1000):
        kx = jax.random.fold_in(k_x, batch)
        x = jax.random.normal(kx, (batch, IN_FEATURES), jnp.float32)

        out = jax.block_until_ready(mlp_classifier_forward(x, params))
        ref = reference_forward(x, params)

        assert out.shape == (batch, OUT_FEATURES)
        max_err = float(jnp.max(jnp.abs(out - ref)))
        # bf16 inputs/weights (f32 accumulation) -> looser tolerance than f32.
        assert max_err < 5e-2, max_err

    print("KERNEL_OK")
</pallas_src>

<mosaic_0001>
module attributes {stable_mosaic.version = 11 : i64} {
  func.func @mlp_kernel(%arg0: i32, %arg1: memref<8x768xbf16, #tpu.memory_space<vmem>>, %arg2: memref<768x512xbf16, #tpu.memory_space<vmem>>, %arg3: memref<1x512xf32, #tpu.memory_space<vmem>>, %arg4: memref<512x128xbf16, #tpu.memory_space<vmem>>, %arg5: memref<1x128xf32, #tpu.memory_space<vmem>>, %arg6: memref<128x128xbf16, #tpu.memory_space<vmem>>, %arg7: memref<1x128xf32, #tpu.memory_space<vmem>>, %arg8: memref<8x128xf32, #tpu.memory_space<vmem>>) attributes {dimension_semantics = [#tpu.dimension_semantics<parallel>], iteration_bounds = array<i64: 1>, scalar_prefetch = 0 : i64, scratch_operands = 0 : i64, tpu.core_type = #tpu.core_type<tc>, window_params = [{transform_indices = @transform_0, window_bounds = array<i64: 8, 768>}, {pipeline_mode = #tpu.pipeline_mode<synchronous>, transform_indices = @transform_1, window_bounds = array<i64: 768, 512>}, {pipeline_mode = #tpu.pipeline_mode<synchronous>, transform_indices = @transform_2, window_bounds = array<i64: 1, 512>}, {pipeline_mode = #tpu.pipeline_mode<synchronous>, transform_indices = @transform_3, window_bounds = array<i64: 512, 128>}, {pipeline_mode = #tpu.pipeline_mode<synchronous>, transform_indices = @transform_4, window_bounds = array<i64: 1, 128>}, {pipeline_mode = #tpu.pipeline_mode<synchronous>, transform_indices = @transform_5, window_bounds = array<i64: 128, 128>}, {pipeline_mode = #tpu.pipeline_mode<synchronous>, transform_indices = @transform_6, window_bounds = array<i64: 1, 128>}, {transform_indices = @transform_7, window_bounds = array<i64: 8, 128>}]} {
    %c0 = arith.constant 0 : index
    %c0_0 = arith.constant 0 : index
    %0 = vector.load %arg1[%c0, %c0_0] : memref<8x768xbf16, #tpu.memory_space<vmem>>, vector<8x768xbf16>
    %c0_1 = arith.constant 0 : index
    %c0_2 = arith.constant 0 : index
    %1 = vector.load %arg2[%c0_1, %c0_2] : memref<768x512xbf16, #tpu.memory_space<vmem>>, vector<768x512xbf16>
    %cst = arith.constant dense<0.000000e+00> : vector<8x512xf32>
    %2 = tpu.matmul %0, %1, %cst {dimension_numbers = #tpu.dot_dimension_numbers<[1], [0], [0], [1], [0, 0, 1, 1], [], []>} : vector<8x768xbf16>, vector<768x512xbf16>, vector<8x512xf32> -> vector<8x512xf32>
    %c0_3 = arith.constant 0 : index
    %c0_4 = arith.constant 0 : index
    %3 = vector.load %arg3[%c0_3, %c0_4] : memref<1x512xf32, #tpu.memory_space<vmem>>, vector<1x512xf32>
    %4 = vector.broadcast %3 : vector<1x512xf32> to vector<8x512xf32>
    %5 = arith.addf %2, %4 : vector<8x512xf32>
    %cst_5 = arith.constant 0.000000e+00 : f32
    %6 = vector.broadcast %cst_5 : f32 to vector<8x512xf32>
    %7 = arith.maximumf %5, %6 : vector<8x512xf32>
    %8 = arith.truncf %7 : vector<8x512xf32> to vector<8x512xbf16>
    %c0_6 = arith.constant 0 : index
    %c0_7 = arith.constant 0 : index
    %9 = vector.load %arg4[%c0_6, %c0_7] : memref<512x128xbf16, #tpu.memory_space<vmem>>, vector<512x128xbf16>
    %cst_8 = arith.constant dense<0.000000e+00> : vector<8x128xf32>
    %10 = tpu.matmul %8, %9, %cst_8 {dimension_numbers = #tpu.dot_dimension_numbers<[1], [0], [0], [1], [0, 0, 1, 1], [], []>} : vector<8x512xbf16>, vector<512x128xbf16>, vector<8x128xf32> -> vector<8x128xf32>
    %c0_9 = arith.constant 0 : index
    %c0_10 = arith.constant 0 : index
    %11 = vector.load %arg5[%c0_9, %c0_10] : memref<1x128xf32, #tpu.memory_space<vmem>>, vector<1x128xf32>
    %12 = vector.broadcast %11 : vector<1x128xf32> to vector<8x128xf32>
    %13 = arith.addf %10, %12 : vector<8x128xf32>
    %cst_11 = arith.constant 0.000000e+00 : f32
    %14 = vector.broadcast %cst_11 : f32 to vector<8x128xf32>
    %15 = arith.maximumf %13, %14 : vector<8x128xf32>
    %16 = arith.truncf %15 : vector<8x128xf32> to vector<8x128xbf16>
    %c0_12 = arith.constant 0 : index
    %c0_13 = arith.constant 0 : index
    %17 = vector.load %arg6[%c0_12, %c0_13] : memref<128x128xbf16, #tpu.memory_space<vmem>>, vector<128x128xbf16>
    %cst_14 = arith.constant dense<0.000000e+00> : vector<8x128xf32>
    %18 = tpu.matmul %16, %17, %cst_14 {dimension_numbers = #tpu.dot_dimension_numbers<[1], [0], [0], [1], [0, 0, 1, 1], [], []>} : vector<8x128xbf16>, vector<128x128xbf16>, vector<8x128xf32> -> vector<8x128xf32>
    %c0_15 = arith.constant 0 : index
    %c0_16 = arith.constant 0 : index
    %19 = vector.load %arg7[%c0_15, %c0_16] : memref<1x128xf32, #tpu.memory_space<vmem>>, vector<1x128xf32>
    %20 = vector.broadcast %19 : vector<1x128xf32> to vector<8x128xf32>
    %21 = arith.addf %18, %20 : vector<8x128xf32>
    %c0_17 = arith.constant 0 : index
    %c0_18 = arith.constant 0 : index
    %22 = vector.load %arg8[%c0_17, %c0_18] : memref<8x128xf32, #tpu.memory_space<vmem>>, vector<8x128xf32>
    tpu.vector_store %arg8[%c0_17, %c0_18], %21 {strides = array<i32>} : memref<8x128xf32, #tpu.memory_space<vmem>>, vector<8x128xf32>,
    return
  }
  func.func @transform_0(%arg0: i32) -> (i32, i32) {
    %c0_i32 = arith.constant 0 : i32
    %c0_i32_0 = arith.constant 0 : i32
    return %arg0, %c0_i32 : i32, i32
  }
  func.func @transform_1(%arg0: i32) -> (i32, i32) {
    %c0_i32 = arith.constant 0 : i32
    %c0_i32_0 = arith.constant 0 : i32
    %c0_i32_1 = arith.constant 0 : i32
    return %c0_i32, %c0_i32_0 : i32, i32
  }
  func.func @transform_2(%arg0: i32) -> (i32, i32) {
    %c0_i32 = arith.constant 0 : i32
    %c0_i32_0 = arith.constant 0 : i32
    %c0_i32_1 = arith.constant 0 : i32
    return %c0_i32, %c0_i32_0 : i32, i32
  }
  func.func @transform_3(%arg0: i32) -> (i32, i32) {
    %c0_i32 = arith.constant 0 : i32
    %c0_i32_0 = arith.constant 0 : i32
    %c0_i32_1 = arith.constant 0 : i32
    return %c0_i32, %c0_i32_0 : i32, i32
  }
  func.func @transform_4(%arg0: i32) -> (i32, i32) {
    %c0_i32 = arith.constant 0 : i32
    %c0_i32_0 = arith.constant 0 : i32
    %c0_i32_1 = arith.constant 0 : i32
    return %c0_i32, %c0_i32_0 : i32, i32
  }
  func.func @transform_5(%arg0: i32) -> (i32, i32) {
    %c0_i32 = arith.constant 0 : i32
    %c0_i32_0 = arith.constant 0 : i32
    %c0_i32_1 = arith.constant 0 : i32
    return %c0_i32, %c0_i32_0 : i32, i32
  }
  func.func @transform_6(%arg0: i32) -> (i32, i32) {
    %c0_i32 = arith.constant 0 : i32
    %c0_i32_0 = arith.constant 0 : i32
    %c0_i32_1 = arith.constant 0 : i32
    return %c0_i32, %c0_i32_0 : i32, i32
  }
  func.func @transform_7(%arg0: i32) -> (i32, i32) {
    %c0_i32 = arith.constant 0 : i32
    %c0_i32_0 = arith.constant 0 : i32
    return %arg0, %c0_i32 : i32, i32
  }
}

</mosaic_0001>

<llo_original>
// kernel: tpu_custom_call.1
$region0: #{tpu_custom_call.1}
  #allocation0 [shape = 'u32[]', space=smem, size = 0x4, offset = 0x4, fixed_abs, tag = 'smem constant byte address 0x4 - core index']
  #allocation1 [shape = 'u32[144,128]{1,0:T(1,128)}', space=vmem, size = 0x12000, scoped, tag = 'internal scratch']
  %s0 = inlined_call_operand.hbm [shape: bf16[8,768], index: 0, kind: input, shape index: {}]
  %s1 = inlined_call_operand.hbm [shape: bf16[768,512], index: 1, kind: input, shape index: {}]
  %s2 = inlined_call_operand.hbm [shape: f32[1,512], index: 2, kind: input, shape index: {}]
  %s3 = inlined_call_operand.hbm [shape: bf16[512,128], index: 3, kind: input, shape index: {}]
  %s4 = inlined_call_operand.vmem [shape: f32[1,128], index: 4, kind: input, shape index: {}]
  %s5 = inlined_call_operand.hbm [shape: bf16[128,128], index: 5, kind: input, shape index: {}]
  %s6 = inlined_call_operand.vmem [shape: f32[1,128], index: 6, kind: input, shape index: {}]
  %s7 = inlined_call_operand.hbm [shape: f32[8,128], index: 7, kind: output, shape index: {}]
  %s8 = sld [smem:[#allocation0]]
  $region58: #{tpu_custom_call.1} parent=0
    _
  %s10 = ssub.s32 1, %s8
  %s11 = scalar_select 0, %s10, %s8
  $region1: #{tpu_custom_call.1} parent=0
    #allocation2 [shape = 'u8[12288]{0}', space=vmem, size = 0x3000, scoped, tag = 'input window, operand 0, single buffered']
    #allocation3 [shape = 's32[1]{0}', space=sflag, size = 0x4, scoped, tag = 'scoped memory for tpu_custom_call.1']
    #allocation4 [shape = 's32[1]{0}', space=sflag, size = 0x4, scoped, tag = 'scoped memory for tpu_custom_call.1']
    #allocation5 [shape = 'u8[786432]{0}', space=vmem, size = 0xc0000, scoped, tag = 'input window, operand 1, single buffered']
    #allocation6 [shape = 's32[1]{0}', space=sflag, size = 0x4, scoped, tag = 'scoped memory for tpu_custom_call.1']
    #allocation7 [shape = 'u8[2048]{0}', space=vmem, size = 0x800, scoped, tag = 'input window, operand 2, single buffered']
    #allocation8 [shape = 'u8[131072]{0}', space=vmem, size = 0x20000, scoped, tag = 'input window, operand 3, single buffered']
    #allocation9 [shape = 's32[1]{0}', space=sflag, size = 0x4, scoped, tag = 'scoped memory for tpu_custom_call.1']
    #allocation10 [shape = 'u8[32768]{0}', space=vmem, size = 0x8000, scoped, tag = 'input window, operand 5, single buffered']
    #allocation11 [shape = 'u8[4096]{0}', space=vmem, size = 0x1000, scoped, tag = 'output window, operand 0, single buffered']
    %12 = vsyncpa [#allocation3], 0
    %13 = vsyncpa [#allocation6], 0
    %14 = vsyncpa [#allocation9], 0
    %15 = vsyncpa [#allocation4], 0
    // Predicated region
    $region2: #{tpu_custom_call.1} parent=1 // pred_check
      _
    $region3: #{tpu_custom_call.1} parent=1 // pred_check_branch
      %17 = sbr.rel (0) target = $region5
    $region4: #{tpu_custom_call.1} parent=1 // pred_region
      %s19 = ssub.s32 384, 384
      %20 = vsyncadd [#allocation3], %s19
      %s22 = sshll.u32 [#allocation2], 4
      %s23 = int_to_ptr.vmem [resolvable:$true] %s22
      %25 = dma.hbm_to_vmem [thread:$0]  %s0, 384, %s23, [#allocation3]
    $region5: #{tpu_custom_call.1} parent=1 // pred_fallthru
      _
    // Predicated region
    $region6: #{tpu_custom_call.1} parent=1 // pred_check
      _
    $region7: #{tpu_custom_call.1} parent=1 // pred_check_branch
      %27 = sbr.rel (0) target = $region9
    $region8: #{tpu_custom_call.1} parent=1 // pred_region
      %s29 = ssub.s32 24576, 24576
      %30 = vsyncadd [#allocation6], %s29
      %s31 = sshll.u32 [#allocation5], 4
      %s32 = int_to_ptr.vmem [resolvable:$true] %s31
      %37 = dma.hbm_to_vmem [thread:$0]  %s1, 24576, %s32, [#allocation6], 256, 256, 16
    $region9: #{tpu_custom_call.1} parent=1 // pred_fallthru
      _
    // Predicated region
    $region10: #{tpu_custom_call.1} parent=1 // pred_check
      _
    $region11: #{tpu_custom_call.1} parent=1 // pred_check_branch
      %39 = sbr.rel (0) target = $region13
    $region12: #{tpu_custom_call.1} parent=1 // pred_region
      %s41 = ssub.s32 64, 64
      %42 = vsyncadd [#allocation6], %s41
      %s44 = sshll.u32 [#allocation7], 4
      %s45 = int_to_ptr.vmem [resolvable:$true] %s44
      %47 = dma.hbm_to_vmem [thread:$0]  %s2, 64, %s45, [#allocation6]
    $region13: #{tpu_custom_call.1} parent=1 // pred_fallthru
      _
    // Predicated region
    $region14: #{tpu_custom_call.1} parent=1 // pred_check
      _
    $region15: #{tpu_custom_call.1} parent=1 // pred_check_branch
      %49 = sbr.rel (0) target = $region17
    $region16: #{tpu_custom_call.1} parent=1 // pred_region
      %s51 = ssub.s32 4096, 4096
      %52 = vsyncadd [#allocation9], %s51
      %s53 = sshll.u32 [#allocation8], 4
      %s54 = int_to_ptr.vmem [resolvable:$true] %s53
      %59 = dma.hbm_to_vmem [thread:$0]  %s3, 4096, %s54, [#allocation9], 64, 64, 4
    $region17: #{tpu_custom_call.1} parent=1 // pred_fallthru
      _
    // Predicated region
    $region18: #{tpu_custom_call.1} parent=1 // pred_check
      _
    $region19: #{tpu_custom_call.1} parent=1 // pred_check_branch
      %61 = sbr.rel (0) target = $region21
    $region20: #{tpu_custom_call.1} parent=1 // pred_region
      _
    $region21: #{tpu_custom_call.1} parent=1 // pred_fallthru
      _
    // Predicated region
    $region22: #{tpu_custom_call.1} parent=1 // pred_check
      _
    $region23: #{tpu_custom_call.1} parent=1 // pred_check_branch
      %63 = sbr.rel (0) target = $region25
    $region24: #{tpu_custom_call.1} parent=1 // pred_region
      %s65 = ssub.s32 1024, 1024
      %66 = vsyncadd [#allocation9], %s65
      %s67 = sshll.u32 [#allocation10], 4
      %s68 = int_to_ptr.vmem [resolvable:$true] %s67
      %73 = dma.hbm_to_vmem [thread:$0]  %s5, 1024, %s68, [#allocation9], 64, 64, 4
    $region25: #{tpu_custom_call.1} parent=1 // pred_fallthru
      _
    // Predicated region
    $region26: #{tpu_custom_call.1} parent=1 // pred_check
      _
    $region27: #{tpu_custom_call.1} parent=1 // pred_check_branch
      %75 = sbr.rel (0) target = $region29
    $region28: #{tpu_custom_call.1} parent=1 // pred_region
      _
    $region29: #{tpu_custom_call.1} parent=1 // pred_fallthru
      _
    // Predicated region
    $region30: #{tpu_custom_call.1} parent=1 // pred_check
      _
    $region31: #{tpu_custom_call.1} parent=1 // pred_check_branch
      %77 = sbr.rel (0) target = $region33
    $region32: #{tpu_custom_call.1} parent=1 // pred_region
      %78 = dma.done [#allocation3], 384
    $region33: #{tpu_custom_call.1} parent=1 // pred_fallthru
      _
    // Predicated region
    $region34: #{tpu_custom_call.1} parent=1 // pred_check
      _
    $region35: #{tpu_custom_call.1} parent=1 // pred_check_branch
      %80 = sbr.rel (0) target = $region37
    $region36: #{tpu_custom_call.1} parent=1 // pred_region
      %81 = dma.done [#allocation6], 24576
    $region37: #{tpu_custom_call.1} parent=1 // pred_fallthru
      _
    // Predicated region
    $region38: #{tpu_custom_call.1} parent=1 // pred_check
      _
    $region39: #{tpu_custom_call.1} parent=1 // pred_check_branch
      %83 = sbr.rel (0) target = $region41
    $region40: #{tpu_custom_call.1} parent=1 // pred_region
      %84 = dma.done [#allocation6], 64
    $region41: #{tpu_custom_call.1} parent=1 // pred_fallthru
      _
    // Predicated region
    $region42: #{tpu_custom_call.1} parent=1 // pred_check
      _
    $region43: #{tpu_custom_call.1} parent=1 // pred_check_branch
      %86 = sbr.rel (0) target = $region45
    $region44: #{tpu_custom_call.1} parent=1 // pred_region
      %87 = dma.done [#allocation9], 4096
    $region45: #{tpu_custom_call.1} parent=1 // pred_fallthru
      _
    // Predicated region
    $region46: #{tpu_custom_call.1} parent=1 // pred_check
      _
    $region47: #{tpu_custom_call.1} parent=1 // pred_check_branch
      %89 = sbr.rel (0) target = $region49
    $region48: #{tpu_custom_call.1} parent=1 // pred_region
      %90 = dma.done [#allocation9], 1024
    $region49: #{tpu_custom_call.1} parent=1 // pred_fallthru
      _
    %v92 = vld [vmem:[#allocation2] sm:$0xff]
    %v93 = vld [vmem:[#allocation2 + $0x8] sm:$0xff]
    %v94 = vld [vmem:[#allocation2 + $0x10] sm:$0xff]
    %v95 = vld [vmem:[#allocation5] sm:$0xff]
    %v96 = vld [vmem:[#allocation5 + $0x8] sm:$0xff]
    %v97 = vld [vmem:[#allocation5 + $0x10] sm:$0xff]
    %v98 = vld [vmem:[#allocation5 + $0x18] sm:$0xff]
    %v99 = vld [vmem:[#allocation5 + $0x20] sm:$0xff]
    %v100 = vld [vmem:[#allocation5 + $0x28] sm:$0xff]
    %v101 = vld [vmem:[#allocation5 + $0x30] sm:$0xff]
    %v102 = vld [vmem:[#allocation5 + $0x38] sm:$0xff]
    %v103 = vld [vmem:[#allocation5 + $0x40] sm:$0xff]
    %v104 = vld [vmem:[#allocation5 + $0x48] sm:$0xff]
    %v105 = vld [vmem:[#allocation5 + $0x50] sm:$0xff]
    %v106 = vld [vmem:[#allocation5 + $0x58] sm:$0xff]
    %v107 = vld [vmem:[#allocation5 + $0x60] sm:$0xff]
    %v108 = vld [vmem:[#allocation5 + $0x68] sm:$0xff]
    %v109 = vld [vmem:[#allocation5 + $0x70] sm:$0xff]
    %v110 = vld [vmem:[#allocation5 + $0x78] sm:$0xff]
    %v111 = vld [vmem:[#allocation5 + $0x80] sm:$0xff]
    %v112 = vld [vmem:[#allocation5 + $0x88] sm:$0xff]
    %v113 = vld [vmem:[#allocation5 + $0x90] sm:$0xff]
    %v114 = vld [vmem:[#allocation5 + $0x98] sm:$0xff]
    %v115 = vld [vmem:[#allocation5 + $0xa0] sm:$0xff]
    %v116 = vld [vmem:[#allocation5 + $0xa8] sm:$0xff]
    %v117 = vld [vmem:[#allocation5 + $0xb0] sm:$0xff]
    %v118 = vld [vmem:[#allocation5 + $0xb8] sm:$0xff]
    %v119 = vld [vmem:[#allocation5 + $0xc0] sm:$0xff]
    %v120 = vld [vmem:[#allocation5 + $0xc8] sm:$0xff]
    %v121 = vld [vmem:[#allocation5 + $0xd0] sm:$0xff]
    %v122 = vld [vmem:[#allocation5 + $0xd8] sm:$0xff]
    %v123 = vld [vmem:[#allocation5 + $0xe0] sm:$0xff]
    %v124 = vld [vmem:[#allocation5 + $0xe8] sm:$0xff]
    %v125 = vld [vmem:[#allocation5 + $0xf0] sm:$0xff]
    %v126 = vld [vmem:[#allocation5 + $0xf8] sm:$0xff]
    %v127 = vld [vmem:[#allocation5 + $0x100] sm:$0xff]
    %v128 = vld [vmem:[#allocation5 + $0x108] sm:$0xff]
    %v129 = vld [vmem:[#allocation5 + $0x110] sm:$0xff]
    %v130 = vld [vmem:[#allocation5 + $0x118] sm:$0xff]
    %v131 = vld [vmem:[#allocation5 + $0x120] sm:$0xff]
    %v132 = vld [vmem:[#allocation5 + $0x128] sm:$0xff]
    %v133 = vld [vmem:[#allocation5 + $0x130] sm:$0xff]
    %v134 = vld [vmem:[#allocation5 + $0x138] sm:$0xff]
    %v135 = vld [vmem:[#allocation5 + $0x140] sm:$0xff]
    %v136 = vld [vmem:[#allocation5 + $0x148] sm:$0xff]
    %v137 = vld [vmem:[#allocation5 + $0x150] sm:$0xff]
    %v138 = vld [vmem:[#allocation5 + $0x158] sm:$0xff]
    %v139 = vld [vmem:[#allocation5 + $0x160] sm:$0xff]
    %v140 = vld [vmem:[#allocation5 + $0x168] sm:$0xff]
    %v141 = vld [vmem:[#allocation5 + $0x170] sm:$0xff]
    %v142 = vld [vmem:[#allocation5 + $0x178] sm:$0xff]
    %v143 = vld [vmem:[#allocation5 + $0x180] sm:$0xff]
    %v144 = vld [vmem:[#allocation5 + $0x188] sm:$0xff]
    %v145 = vld [vmem:[#allocation5 + $0x190] sm:$0xff]
    %v146 = vld [vmem:[#allocation5 + $0x198] sm:$0xff]
    %v147 = vld [vmem:[#allocation5 + $0x1a0] sm:$0xff]
    %v148 = vld [vmem:[#allocation5 + $0x1a8] sm:$0xff]
    %v149 = vld [vmem:[#allocation5 + $0x1b0] sm:$0xff]
    %v150 = vld [vmem:[#allocation5 + $0x1b8] sm:$0xff]
    %v151 = vld [vmem:[#allocation5 + $0x1c0] sm:$0xff]
    %v152 = vld [vmem:[#allocation5 + $0x1c8] sm:$0xff]
    %v153 = vld [vmem:[#allocation5 + $0x1d0] sm:$0xff]
    %v154 = vld [vmem:[#allocation5 + $0x1d8] sm:$0xff]
    %v155 = vld [vmem:[#allocation5 + $0x1e0] sm:$0xff]
    %v156 = vld [vmem:[#allocation5 + $0x1e8] sm:$0xff]
    %v157 = vld [vmem:[#allocation5 + $0x1f0] sm:$0xff]
    %v158 = vld [vmem:[#allocation5 + $0x1f8] sm:$0xff]
    %v159 = vld [vmem:[#allocation5 + $0x200] sm:$0xff]
    %v160 = vld [vmem:[#allocation5 + $0x208] sm:$0xff]
    %v161 = vld [vmem:[#allocation5 + $0x210] sm:$0xff]
    %v162 = vld [vmem:[#allocation5 + $0x218] sm:$0xff]
    %v163 = vld [vmem:[#allocation5 + $0x220] sm:$0xff]
    %v164 = vld [vmem:[#allocation5 + $0x228] sm:$0xff]
    %v165 = vld [vmem:[#allocation5 + $0x230] sm:$0xff]
    %v166 = vld [vmem:[#allocation5 + $0x238] sm:$0xff]
    %v167 = vld [vmem:[#allocation5 + $0x240] sm:$0xff]
    %v168 = vld [vmem:[#allocation5 + $0x248] sm:$0xff]
    %v169 = vld [vmem:[#allocation5 + $0x250] sm:$0xff]
    %v170 = vld [vmem:[#allocation5 + $0x258] sm:$0xff]
    %v171 = vld [vmem:[#allocation5 + $0x260] sm:$0xff]
    %v172 = vld [vmem:[#allocation5 + $0x268] sm:$0xff]
    %v173 = vld [vmem:[#allocation5 + $0x270] sm:$0xff]
    %v174 = vld [vmem:[#allocation5 + $0x278] sm:$0xff]
    %v175 = vld [vmem:[#allocation5 + $0x280] sm:$0xff]
    %v176 = vld [vmem:[#allocation5 + $0x288] sm:$0xff]
    %v177 = vld [vmem:[#allocation5 + $0x290] sm:$0xff]
    %v178 = vld [vmem:[#allocation5 + $0x298] sm:$0xff]
    %v179 = vld [vmem:[#allocation5 + $0x2a0] sm:$0xff]
    %v180 = vld [vmem:[#allocation5 + $0x2a8] sm:$0xff]
    %v181 = vld [vmem:[#allocation5 + $0x2b0] sm:$0xff]
    %v182 = vld [vmem:[#allocation5 + $0x2b8] sm:$0xff]
    %v183 = vld [vmem:[#allocation5 + $0x2c0] sm:$0xff]
    %v184 = vld [vmem:[#allocation5 + $0x2c8] sm:$0xff]
    %v185 = vld [vmem:[#allocation5 + $0x2d0] sm:$0xff]
    %v186 = vld [vmem:[#allocation5 + $0x2d8] sm:$0xff]
    %v187 = vld [vmem:[#allocation5 + $0x2e0] sm:$0xff]
    %v188 = vld [vmem:[#allocation5 + $0x2e8] sm:$0xff]
    %v189 = vld [vmem:[#allocation5 + $0x2f0] sm:$0xff]
    %v190 = vld [vmem:[#allocation5 + $0x2f8] sm:$0xff]
    %v191 = vld [vmem:[#allocation5 + $0x300] sm:$0xff]
    %v192 = vld [vmem:[#allocation5 + $0x308] sm:$0xff]
    %v193 = vld [vmem:[#allocation5 + $0x310] sm:$0xff]
    %v194 = vld [vmem:[#allocation5 + $0x318] sm:$0xff]
    %v195 = vld [vmem:[#allocation5 + $0x320] sm:$0xff]
    %v196 = vld [vmem:[#allocation5 + $0x328] sm:$0xff]
    %v197 = vld [vmem:[#allocation5 + $0x330] sm:$0xff]
    %v198 = vld [vmem:[#allocation5 + $0x338] sm:$0xff]
    %v199 = vld [vmem:[#allocation5 + $0x340] sm:$0xff]
    %v200 = vld [vmem:[#allocation5 + $0x348] sm:$0xff]
    %v201 = vld [vmem:[#allocation5 + $0x350] sm:$0xff]
    %v202 = vld [vmem:[#allocation5 + $0x358] sm:$0xff]
    %v203 = vld [vmem:[#allocation5 + $0x360] sm:$0xff]
    %v204 = vld [vmem:[#allocation5 + $0x368] sm:$0xff]
    %v205 = vld [vmem:[#allocation5 + $0x370] sm:$0xff]
    %v206 = vld [vmem:[#allocation5 + $0x378] sm:$0xff]
    %v207 = vld [vmem:[#allocation5 + $0x380] sm:$0xff]
    %v208 = vld [vmem:[#allocation5 + $0x388] sm:$0xff]
    %v209 = vld [vmem:[#allocation5 + $0x390] sm:$0xff]
    %v210 = vld [vmem:[#allocation5 + $0x398] sm:$0xff]
    %v211 = vld [vmem:[#allocation5 + $0x3a0] sm:$0xff]
    %v212 = vld [vmem:[#allocation5 + $0x3a8] sm:$0xff]
    %v213 = vld [vmem:[#allocation5 + $0x3b0] sm:$0xff]
    %v214 = vld [vmem:[#allocation5 + $0x3b8] sm:$0xff]
    %v215 = vld [vmem:[#allocation5 + $0x3c0] sm:$0xff]
    %v216 = vld [vmem:[#allocation5 + $0x3c8] sm:$0xff]
    %v217 = vld [vmem:[#allocation5 + $0x3d0] sm:$0xff]
    %v218 = vld [vmem:[#allocation5 + $0x3d8] sm:$0xff]
    %v219 = vld [vmem:[#allocation5 + $0x3e0] sm:$0xff]
    %v220 = vld [vmem:[#allocation5 + $0x3e8] sm:$0xff]
    %v221 = vld [vmem:[#allocation5 + $0x3f0] sm:$0xff]
    %v222 = vld [vmem:[#allocation5 + $0x3f8] sm:$0xff]
    %v223 = vld [vmem:[#allocation5 + $0x400] sm:$0xff]
    %v224 = vld [vmem:[#allocation5 + $0x408] sm:$0xff]
    %v225 = vld [vmem:[#allocation5 + $0x410] sm:$0xff]
    %v226 = vld [vmem:[#allocation5 + $0x418] sm:$0xff]
    %v227 = vld [vmem:[#allocation5 + $0x420] sm:$0xff]
    %v228 = vld [vmem:[#allocation5 + $0x428] sm:$0xff]
    %v229 = vld [vmem:[#allocation5 + $0x430] sm:$0xff]
    %v230 = vld [vmem:[#allocation5 + $0x438] sm:$0xff]
    %v231 = vld [vmem:[#allocation5 + $0x440] sm:$0xff]
    %v232 = vld [vmem:[#allocation5 + $0x448] sm:$0xff]
    %v233 = vld [vmem:[#allocation5 + $0x450] sm:$0xff]
    %v234 = vld [vmem:[#allocation5 + $0x458] sm:$0xff]
    %v235 = vld [vmem:[#allocation5 + $0x460] sm:$0xff]
    %v236 = vld [vmem:[#allocation5 + $0x468] sm:$0xff]
    %v237 = vld [vmem:[#allocation5 + $0x470] sm:$0xff]
    %v238 = vld [vmem:[#allocation5 + $0x478] sm:$0xff]
    %v239 = vld [vmem:[#allocation5 + $0x480] sm:$0xff]
    %v240 = vld [vmem:[#allocation5 + $0x488] sm:$0xff]
    %v241 = vld [vmem:[#allocation5 + $0x490] sm:$0xff]
    %v242 = vld [vmem:[#allocation5 + $0x498] sm:$0xff]
    %v243 = vld [vmem:[#allocation5 + $0x4a0] sm:$0xff]
    %v244 = vld [vmem:[#allocation5 + $0x4a8] sm:$0xff]
    %v245 = vld [vmem:[#allocation5 + $0x4b0] sm:$0xff]
    %v246 = vld [vmem:[#allocation5 + $0x4b8] sm:$0xff]
    %v247 = vld [vmem:[#allocation5 + $0x4c0] sm:$0xff]
    %v248 = vld [vmem:[#allocation5 + $0x4c8] sm:$0xff]
    %v249 = vld [vmem:[#allocation5 + $0x4d0] sm:$0xff]
    %v250 = vld [vmem:[#allocation5 + $0x4d8] sm:$0xff]
    %v251 = vld [vmem:[#allocation5 + $0x4e0] sm:$0xff]
    %v252 = vld [vmem:[#allocation5 + $0x4e8] sm:$0xff]
    %v253 = vld [vmem:[#allocation5 + $0x4f0] sm:$0xff]
    %v254 = vld [vmem:[#allocation5 + $0x4f8] sm:$0xff]
    %v255 = vld [vmem:[#allocation5 + $0x500] sm:$0xff]
    %v256 = vld [vmem:[#allocation5 + $0x508] sm:$0xff]
    %v257 = vld [vmem:[#allocation5 + $0x510] sm:$0xff]
    %v258 = vld [vmem:[#allocation5 + $0x518] sm:$0xff]
    %v259 = vld [vmem:[#allocation5 + $0x520] sm:$0xff]
    %v260 = vld [vmem:[#allocation5 + $0x528] sm:$0xff]
    %v261 = vld [vmem:[#allocation5 + $0x530] sm:$0xff]
    %v262 = vld [vmem:[#allocation5 + $0x538] sm:$0xff]
    %v263 = vld [vmem:[#allocation5 + $0x540] sm:$0xff]
    %v264 = vld [vmem:[#allocation5 + $0x548] sm:$0xff]
    %v265 = vld [vmem:[#allocation5 + $0x550] sm:$0xff]
    %v266 = vld [vmem:[#allocation5 + $0x558] sm:$0xff]
    %v267 = vld [vmem:[#allocation5 + $0x560] sm:$0xff]
    %v268 = vld [vmem:[#allocation5 + $0x568] sm:$0xff]
    %v269 = vld [vmem:[#allocation5 + $0x570] sm:$0xff]
    %v270 = vld [vmem:[#allocation5 + $0x578] sm:$0xff]
    %v271 = vld [vmem:[#allocation5 + $0x580] sm:$0xff]
    %v272 = vld [vmem:[#allocation5 + $0x588] sm:$0xff]
    %v273 = vld [vmem:[#allocation5 + $0x590] sm:$0xff]
    %v274 = vld [vmem:[#allocation5 + $0x598] sm:$0xff]
    %v275 = vld [vmem:[#allocation5 + $0x5a0] sm:$0xff]
    %v276 = vld [vmem:[#allocation5 + $0x5a8] sm:$0xff]
    %v277 = vld [vmem:[#allocation5 + $0x5b0] sm:$0xff]
    %v278 = vld [vmem:[#allocation5 + $0x5b8] sm:$0xff]
    %v279 = vld [vmem:[#allocation5 + $0x5c0] sm:$0xff]
    %v280 = vld [vmem:[#allocation5 + $0x5c8] sm:$0xff]
    %v281 = vld [vmem:[#allocation5 + $0x5d0] sm:$0xff]
    %v282 = vld [vmem:[#allocation5 + $0x5d8] sm:$0xff]
    %v283 = vld [vmem:[#allocation5 + $0x5e0] sm:$0xff]
    %v284 = vld [vmem:[#allocation5 + $0x5e8] sm:$0xff]
    %v285 = vld [vmem:[#allocation5 + $0x5f0] sm:$0xff]
    %v286 = vld [vmem:[#allocation5 + $0x5f8] sm:$0xff]
    %v287 = vld [vmem:[#allocation7] sm:$0xf]
    %v289 = vlaneseq
    %v290 = vshrl.u32 %v289, 7
    %v291 = vsub.s32 0, %v290
    %v292 = vrot.slane %v287, %v291
    %v293 = vlaneseq
    %v294 = vshrl.u32 %v293, 7
    %v295 = vsub.s32 1, %v294
    %v296 = vrot.slane %v287, %v295
    %v297 = vlaneseq
    %v298 = vshrl.u32 %v297, 7
    %v299 = vsub.s32 2, %v298
    %v300 = vrot.slane %v287, %v299
    %v301 = vlaneseq
    %v302 = vshrl.u32 %v301, 7
    %v303 = vsub.s32 3, %v302
    %v304 = vrot.slane %v287, %v303
    %v312 = vunpack.c.l.b16 %v92
    %v313 = vunpack.c.h.b16 %v92
    %v314 = vunpack.c.l.b16 %v93
    %v315 = vunpack.c.h.b16 %v93
    %v316 = vunpack.c.l.b16 %v94
    %v317 = vunpack.c.h.b16 %v94
    %v318 = vpack.c.b16 %v312, %v312
    %v319 = vpack.c.b16 %v313, %v313
    %v320 = vpack.c.b16 %v314, %v314
    %v321 = vpack.c.b16 %v315, %v315
    %v322 = vpack.c.b16 %v316, %v316
    %v323 = vpack.c.b16 %v317, %v317
    %v522 = vunpack.c.l.b16 %v95
    %v523 = vunpack.c.h.b16 %v95
    %v524 = vunpack.c.l.b16 %v96
    %v525 = vunpack.c.h.b16 %v96
    %v526 = vunpack.c.l.b16 %v97
    %v527 = vunpack.c.h.b16 %v97
    %v528 = vunpack.c.l.b16 %v98
    %v529 = vunpack.c.h.b16 %v98
    %v530 = vunpack.c.l.b16 %v99
    %v531 = vunpack.c.h.b16 %v99
    %v532 = vunpack.c.l.b16 %v100
    %v533 = vunpack.c.h.b16 %v100
    %v534 = vunpack.c.l.b16 %v101
    %v535 = vunpack.c.h.b16 %v101
    %v536 = vunpack.c.l.b16 %v102
    %v537 = vunpack.c.h.b16 %v102
    %v538 = vunpack.c.l.b16 %v103
    %v539 = vunpack.c.h.b16 %v103
    %v540 = vunpack.c.l.b16 %v104
    %v541 = vunpack.c.h.b16 %v104
    %v542 = vunpack.c.l.b16 %v105
    %v543 = vunpack.c.h.b16 %v105
    %v544 = vunpack.c.l.b16 %v106
    %v545 = vunpack.c.h.b16 %v106
    %v546 = vunpack.c.l.b16 %v107
    %v547 = vunpack.c.h.b16 %v107
    %v548 = vunpack.c.l.b16 %v108
    %v549 = vunpack.c.h.b16 %v108
    %v550 = vunpack.c.l.b16 %v109
    %v551 = vunpack.c.h.b16 %v109
    %v552 = vunpack.c.l.b16 %v110
    %v553 = vunpack.c.h.b16 %v110
    %v554 = vunpack.c.l.b16 %v111
    %v555 = vunpack.c.h.b16 %v111
    %v556 = vunpack.c.l.b16 %v112
    %v557 = vunpack.c.h.b16 %v112
    %v558 = vunpack.c.l.b16 %v113
    %v559 = vunpack.c.h.b16 %v113
    %v560 = vunpack.c.l.b16 %v114
    %v561 = vunpack.c.h.b16 %v114
    %v562 = vunpack.c.l.b16 %v115
    %v563 = vunpack.c.h.b16 %v115
    %v564 = vunpack.c.l.b16 %v116
    %v565 = vunpack.c.h.b16 %v116
    %v566 = vunpack.c.l.b16 %v117
    %v567 = vunpack.c.h.b16 %v117
    %v568 = vunpack.c.l.b16 %v118
    %v569 = vunpack.c.h.b16 %v118
    %v570 = vunpack.c.l.b16 %v119
    %v571 = vunpack.c.h.b16 %v119
    %v572 = vunpack.c.l.b16 %v120
    %v573 = vunpack.c.h.b16 %v120
    %v574 = vunpack.c.l.b16 %v121
    %v575 = vunpack.c.h.b16 %v121
    %v576 = vunpack.c.l.b16 %v122
    %v577 = vunpack.c.h.b16 %v122
    %v578 = vunpack.c.l.b16 %v123
    %v579 = vunpack.c.h.b16 %v123
    %v580 = vunpack.c.l.b16 %v124
    %v581 = vunpack.c.h.b16 %v124
    %v582 = vunpack.c.l.b16 %v125
    %v583 = vunpack.c.h.b16 %v125
    %v584 = vunpack.c.l.b16 %v126
    %v585 = vunpack.c.h.b16 %v126
    %v586 = vunpack.c.l.b16 %v127
    %v587 = vunpack.c.h.b16 %v127
    %v588 = vunpack.c.l.b16 %v128
    %v589 = vunpack.c.h.b16 %v128
    %v590 = vunpack.c.l.b16 %v129
    %v591 = vunpack.c.h.b16 %v129
    %v592 = vunpack.c.l.b16 %v130
    %v593 = vunpack.c.h.b16 %v130
    %v594 = vunpack.c.l.b16 %v131
    %v595 = vunpack.c.h.b16 %v131
    %v596 = vunpack.c.l.b16 %v132
    %v597 = vunpack.c.h.b16 %v132
    %v598 = vunpack.c.l.b16 %v133
    %v599 = vunpack.c.h.b16 %v133
    %v600 = vunpack.c.l.b16 %v134
    %v601 = vunpack.c.h.b16 %v134
    %v602 = vunpack.c.l.b16 %v135
    %v603 = vunpack.c.h.b16 %v135
    %v604 = vunpack.c.l.b16 %v136
    %v605 = vunpack.c.h.b16 %v136
    %v606 = vunpack.c.l.b16 %v137
    %v607 = vunpack.c.h.b16 %v137
    %v608 = vunpack.c.l.b16 %v138
    %v609 = vunpack.c.h.b16 %v138
    %v610 = vunpack.c.l.b16 %v139
    %v611 = vunpack.c.h.b16 %v139
    %v612 = vunpack.c.l.b16 %v140
    %v613 = vunpack.c.h.b16 %v140
    %v614 = vunpack.c.l.b16 %v141
    %v615 = vunpack.c.h.b16 %v141
    %v616 = vunpack.c.l.b16 %v142
    %v617 = vunpack.c.h.b16 %v142
    %v618 = vunpack.c.l.b16 %v143
    %v619 = vunpack.c.h.b16 %v143
    %v620 = vunpack.c.l.b16 %v144
    %v621 = vunpack.c.h.b16 %v144
    %v622 = vunpack.c.l.b16 %v145
    %v623 = vunpack.c.h.b16 %v145
    %v624 = vunpack.c.l.b16 %v146
    %v625 = vunpack.c.h.b16 %v146
    %v626 = vunpack.c.l.b16 %v147
    %v627 = vunpack.c.h.b16 %v147
    %v628 = vunpack.c.l.b16 %v148
    %v629 = vunpack.c.h.b16 %v148
    %v630 = vunpack.c.l.b16 %v149
    %v631 = vunpack.c.h.b16 %v149
    %v632 = vunpack.c.l.b16 %v150
    %v633 = vunpack.c.h.b16 %v150
    %v634 = vunpack.c.l.b16 %v151
    %v635 = vunpack.c.h.b16 %v151
    %v636 = vunpack.c.l.b16 %v152
    %v637 = vunpack.c.h.b16 %v152
    %v638 = vunpack.c.l.b16 %v153
    %v639 = vunpack.c.h.b16 %v153
    %v640 = vunpack.c.l.b16 %v154
    %v641 = vunpack.c.h.b16 %v154
    %v642 = vunpack.c.l.b16 %v155
    %v643 = vunpack.c.h.b16 %v155
    %v644 = vunpack.c.l.b16 %v156
    %v645 = vunpack.c.h.b16 %v156
    %v646 = vunpack.c.l.b16 %v157
    %v647 = vunpack.c.h.b16 %v157
    %v648 = vunpack.c.l.b16 %v158
    %v649 = vunpack.c.h.b16 %v158
    %v650 = vunpack.c.l.b16 %v159
    %v651 = vunpack.c.h.b16 %v159
    %v652 = vunpack.c.l.b16 %v160
    %v653 = vunpack.c.h.b16 %v160
    %v654 = vunpack.c.l.b16 %v161
    %v655 = vunpack.c.h.b16 %v161
    %v656 = vunpack.c.l.b16 %v162
    %v657 = vunpack.c.h.b16 %v162
    %v658 = vunpack.c.l.b16 %v163
    %v659 = vunpack.c.h.b16 %v163
    %v660 = vunpack.c.l.b16 %v164
    %v661 = vunpack.c.h.b16 %v164
    %v662 = vunpack.c.l.b16 %v165
    %v663 = vunpack.c.h.b16 %v165
    %v664 = vunpack.c.l.b16 %v166
    %v665 = vunpack.c.h.b16 %v166
    %v666 = vunpack.c.l.b16 %v167
    %v667 = vunpack.c.h.b16 %v167
    %v668 = vunpack.c.l.b16 %v168
    %v669 = vunpack.c.h.b16 %v168
    %v670 = vunpack.c.l.b16 %v169
    %v671 = vunpack.c.h.b16 %v169
    %v672 = vunpack.c.l.b16 %v170
    %v673 = vunpack.c.h.b16 %v170
    %v674 = vunpack.c.l.b16 %v171
    %v675 = vunpack.c.h.b16 %v171
    %v676 = vunpack.c.l.b16 %v172
    %v677 = vunpack.c.h.b16 %v172
    %v678 = vunpack.c.l.b16 %v173
    %v679 = vunpack.c.h.b16 %v173
    %v680 = vunpack.c.l.b16 %v174
    %v681 = vunpack.c.h.b16 %v174
    %v682 = vunpack.c.l.b16 %v175
    %v683 = vunpack.c.h.b16 %v175
    %v684 = vunpack.c.l.b16 %v176
    %v685 = vunpack.c.h.b16 %v176
    %v686 = vunpack.c.l.b16 %v177
    %v687 = vunpack.c.h.b16 %v177
    %v688 = vunpack.c.l.b16 %v178
    %v689 = vunpack.c.h.b16 %v178
    %v690 = vunpack.c.l.b16 %v179
    %v691 = vunpack.c.h.b16 %v179
    %v692 = vunpack.c.l.b16 %v180
    %v693 = vunpack.c.h.b16 %v180
    %v694 = vunpack.c.l.b16 %v181
    %v695 = vunpack.c.h.b16 %v181
    %v696 = vunpack.c.l.b16 %v182
    %v697 = vunpack.c.h.b16 %v182
    %v698 = vunpack.c.l.b16 %v183
    %v699 = vunpack.c.h.b16 %v183
    %v700 = vunpack.c.l.b16 %v184
    %v701 = vunpack.c.h.b16 %v184
    %v702 = vunpack.c.l.b16 %v185
    %v703 = vunpack.c.h.b16 %v185
    %v704 = vunpack.c.l.b16 %v186
    %v705 = vunpack.c.h.b16 %v186
    %v706 = vunpack.c.l.b16 %v187
    %v707 = vunpack.c.h.b16 %v187
    %v708 = vunpack.c.l.b16 %v188
    %v709 = vunpack.c.h.b16 %v188
    %v710 = vunpack.c.l.b16 %v189
    %v711 = vunpack.c.h.b16 %v189
    %v712 = vunpack.c.l.b16 %v190
    %v713 = vunpack.c.h.b16 %v190
    %v714 = vunpack.c.l.b16 %v191
    %v715 = vunpack.c.h.b16 %v191
    %v716 = vunpack.c.l.b16 %v192
    %v717 = vunpack.c.h.b16 %v192
    %v718 = vunpack.c.l.b16 %v193
    %v719 = vunpack.c.h.b16 %v193
    %v720 = vunpack.c.l.b16 %v194
    %v721 = vunpack.c.h.b16 %v194
    %v722 = vunpack.c.l.b16 %v195
    %v723 = vunpack.c.h.b16 %v195
    %v724 = vunpack.c.l.b16 %v196
    %v725 = vunpack.c.h.b16 %v196
    %v726 = vunpack.c.l.b16 %v197
    %v727 = vunpack.c.h.b16 %v197
    %v728 = vunpack.c.l.b16 %v198
    %v729 = vunpack.c.h.b16 %v198
    %v730 = vunpack.c.l.b16 %v199
    %v731 = vunpack.c.h.b16 %v199
    %v732 = vunpack.c.l.b16 %v200
    %v733 = vunpack.c.h.b16 %v200
    %v734 = vunpack.c.l.b16 %v201
    %v735 = vunpack.c.h.b16 %v201
    %v736 = vunpack.c.l.b16 %v202
    %v737 = vunpack.c.h.b16 %v202
    %v738 = vunpack.c.l.b16 %v203
    %v739 = vunpack.c.h.b16 %v203
    %v740 = vunpack.c.l.b16 %v204
    %v741 = vunpack.c.h.b16 %v204
    %v742 = vunpack.c.l.b16 %v205
    %v743 = vunpack.c.h.b16 %v205
    %v744 = vunpack.c.l.b16 %v206
    %v745 = vunpack.c.h.b16 %v206
    %v746 = vunpack.c.l.b16 %v207
    %v747 = vunpack.c.h.b16 %v207
    %v748 = vunpack.c.l.b16 %v208
    %v749 = vunpack.c.h.b16 %v208
    %v750 = vunpack.c.l.b16 %v209
    %v751 = vunpack.c.h.b16 %v209
    %v752 = vunpack.c.l.b16 %v210
    %v753 = vunpack.c.h.b16 %v210
    %v754 = vunpack.c.l.b16 %v211
    %v755 = vunpack.c.h.b16 %v211
    %v756 = vunpack.c.l.b16 %v212
    %v757 = vunpack.c.h.b16 %v212
    %v758 = vunpack.c.l.b16 %v213
    %v759 = vunpack.c.h.b16 %v213
    %v760 = vunpack.c.l.b16 %v214
    %v761 = vunpack.c.h.b16 %v214
    %v762 = vunpack.c.l.b16 %v215
    %v763 = vunpack.c.h.b16 %v215
    %v764 = vunpack.c.l.b16 %v216
    %v765 = vunpack.c.h.b16 %v216
    %v766 = vunpack.c.l.b16 %v217
    %v767 = vunpack.c.h.b16 %v217
    %v768 = vunpack.c.l.b16 %v218
    %v769 = vunpack.c.h.b16 %v218
    %v770 = vunpack.c.l.b16 %v219
    %v771 = vunpack.c.h.b16 %v219
    %v772 = vunpack.c.l.b16 %v220
    %v773 = vunpack.c.h.b16 %v220
    %v774 = vunpack.c.l.b16 %v221
    %v775 = vunpack.c.h.b16 %v221
    %v776 = vunpack.c.l.b16 %v222
    %v777 = vunpack.c.h.b16 %v222
    %v778 = vunpack.c.l.b16 %v223
    %v779 = vunpack.c.h.b16 %v223
    %v780 = vunpack.c.l.b16 %v224
    %v781 = vunpack.c.h.b16 %v224
    %v782 = vunpack.c.l.b16 %v225
    %v783 = vunpack.c.h.b16 %v225
    %v784 = vunpack.c.l.b16 %v226
    %v785 = vunpack.c.h.b16 %v226
    %v786 = vunpack.c.l.b16 %v227
    %v787 = vunpack.c.h.b16 %v227
    %v788 = vunpack.c.l.b16 %v228
    %v789 = vunpack.c.h.b16 %v228
    %v790 = vunpack.c.l.b16 %v229
    %v791 = vunpack.c.h.b16 %v229
    %v792 = vunpack.c.l.b16 %v230
    %v793 = vunpack.c.h.b16 %v230
    %v794 = vunpack.c.l.b16 %v231
    %v795 = vunpack.c.h.b16 %v231
    %v796 = vunpack.c.l.b16 %v232
    %v797 = vunpack.c.h.b16 %v232
    %v798 = vunpack.c.l.b16 %v233
    %v799 = vunpack.c.h.b16 %v233
    %v800 = vunpack.c.l.b16 %v234
    %v801 = vunpack.c.h.b16 %v234
    %v802 = vunpack.c.l.b16 %v235
    %v803 = vunpack.c.h.b16 %v235
    %v804 = vunpack.c.l.b16 %v236
    %v805 = vunpack.c.h.b16 %v236
    %v806 = vunpack.c.l.b16 %v237
    %v807 = vunpack.c.h.b16 %v237
    %v808 = vunpack.c.l.b16 %v238
    %v809 = vunpack.c.h.b16 %v238
    %v810 = vunpack.c.l.b16 %v239
    %v811 = vunpack.c.h.b16 %v239
    %v812 = vunpack.c.l.b16 %v240
    %v813 = vunpack.c.h.b16 %v240
    %v814 = vunpack.c.l.b16 %v241
    %v815 = vunpack.c.h.b16 %v241
    %v816 = vunpack.c.l.b16 %v242
    %v817 = vunpack.c.h.b16 %v242
    %v818 = vunpack.c.l.b16 %v243
    %v819 = vunpack.c.h.b16 %v243
    %v820 = vunpack.c.l.b16 %v244
    %v821 = vunpack.c.h.b16 %v244
    %v822 = vunpack.c.l.b16 %v245
    %v823 = vunpack.c.h.b16 %v245
    %v824 = vunpack.c.l.b16 %v246
    %v825 = vunpack.c.h.b16 %v246
    %v826 = vunpack.c.l.b16 %v247
    %v827 = vunpack.c.h.b16 %v247
    %v828 = vunpack.c.l.b16 %v248
    %v829 = vunpack.c.h.b16 %v248
    %v830 = vunpack.c.l.b16 %v249
    %v831 = vunpack.c.h.b16 %v249
    %v832 = vunpack.c.l.b16 %v250
    %v833 = vunpack.c.h.b16 %v250
    %v834 = vunpack.c.l.b16 %v251
    %v835 = vunpack.c.h.b16 %v251
    %v836 = vunpack.c.l.b16 %v252
    %v837 = vunpack.c.h.b16 %v252
    %v838 = vunpack.c.l.b16 %v253
    %v839 = vunpack.c.h.b16 %v253
    %v840 = vunpack.c.l.b16 %v254
    %v841 = vunpack.c.h.b16 %v254
    %v842 = vunpack.c.l.b16 %v255
    %v843 = vunpack.c.h.b16 %v255
    %v844 = vunpack.c.l.b16 %v256
    %v845 = vunpack.c.h.b16 %v256
    %v846 = vunpack.c.l.b16 %v257
    %v847 = vunpack.c.h.b16 %v257
    %v848 = vunpack.c.l.b16 %v258
    %v849 = vunpack.c.h.b16 %v258
    %v850 = vunpack.c.l.b16 %v259
    %v851 = vunpack.c.h.b16 %v259
    %v852 = vunpack.c.l.b16 %v260
    %v853 = vunpack.c.h.b16 %v260
    %v854 = vunpack.c.l.b16 %v261
    %v855 = vunpack.c.h.b16 %v261
    %v856 = vunpack.c.l.b16 %v262
    %v857 = vunpack.c.h.b16 %v262
    %v858 = vunpack.c.l.b16 %v263
    %v859 = vunpack.c.h.b16 %v263
    %v860 = vunpack.c.l.b16 %v264
    %v861 = vunpack.c.h.b16 %v264
    %v862 = vunpack.c.l.b16 %v265
    %v863 = vunpack.c.h.b16 %v265
    %v864 = vunpack.c.l.b16 %v266
    %v865 = vunpack.c.h.b16 %v266
    %v866 = vunpack.c.l.b16 %v267
    %v867 = vunpack.c.h.b16 %v267
    %v868 = vunpack.c.l.b16 %v268
    %v869 = vunpack.c.h.b16 %v268
    %v870 = vunpack.c.l.b16 %v269
    %v871 = vunpack.c.h.b16 %v269
    %v872 = vunpack.c.l.b16 %v270
    %v873 = vunpack.c.h.b16 %v270
    %v874 = vunpack.c.l.b16 %v271
    %v875 = vunpack.c.h.b16 %v271
    %v876 = vunpack.c.l.b16 %v272
    %v877 = vunpack.c.h.b16 %v272
    %v878 = vunpack.c.l.b16 %v273
    %v879 = vunpack.c.h.b16 %v273
    %v880 = vunpack.c.l.b16 %v274
    %v881 = vunpack.c.h.b16 %v274
    %v882 = vunpack.c.l.b16 %v275
    %v883 = vunpack.c.h.b16 %v275
    %v884 = vunpack.c.l.b16 %v276
    %v885 = vunpack.c.h.b16 %v276
    %v886 = vunpack.c.l.b16 %v277
    %v887 = vunpack.c.h.b16 %v277
    %v888 = vunpack.c.l.b16 %v278
    %v889 = vunpack.c.h.b16 %v278
    %v890 = vunpack.c.l.b16 %v279
    %v891 = vunpack.c.h.b16 %v279
    %v892 = vunpack.c.l.b16 %v280
    %v893 = vunpack.c.h.b16 %v280
    %v894 = vunpack.c.l.b16 %v281
    %v895 = vunpack.c.h.b16 %v281
    %v896 = vunpack.c.l.b16 %v282
    %v897 = vunpack.c.h.b16 %v282
    %v898 = vunpack.c.l.b16 %v283
    %v899 = vunpack.c.h.b16 %v283
    %v900 = vunpack.c.l.b16 %v284
    %v901 = vunpack.c.h.b16 %v284
    %v902 = vunpack.c.l.b16 %v285
    %v903 = vunpack.c.h.b16 %v285
    %v904 = vunpack.c.l.b16 %v286
    %v905 = vunpack.c.h.b16 %v286
    %v906 = vpack.c.b16 %v526, %v522
    %v907 = vpack.c.b16 %v527, %v523
    %v908 = vpack.c.b16 %v528, %v524
    %v909 = vpack.c.b16 %v529, %v525
    %v910 = vpack.c.b16 %v534, %v530
    %v911 = vpack.c.b16 %v535, %v531
    %v912 = vpack.c.b16 %v536, %v532
    %v913 = vpack.c.b16 %v537, %v533
    %v914 = vpack.c.b16 %v542, %v538
    %v915 = vpack.c.b16 %v543, %v539
    %v916 = vpack.c.b16 %v544, %v540
    %v917 = vpack.c.b16 %v545, %v541
    %v918 = vpack.c.b16 %v550, %v546
    %v919 = vpack.c.b16 %v551, %v547
    %v920 = vpack.c.b16 %v552, %v548
    %v921 = vpack.c.b16 %v553, %v549
    %v922 = vpack.c.b16 %v558, %v554
    %v923 = vpack.c.b16 %v559, %v555
    %v924 = vpack.c.b16 %v560, %v556
    %v925 = vpack.c.b16 %v561, %v557
    %v926 = vpack.c.b16 %v566, %v562
    %v927 = vpack.c.b16 %v567, %v563
    %v928 = vpack.c.b16 %v568, %v564
    %v929 = vpack.c.b16 %v569, %v565
    %v930 = vpack.c.b16 %v574, %v570
    %v931 = vpack.c.b16 %v575, %v571
    %v932 = vpack.c.b16 %v576, %v572
    %v933 = vpack.c.b16 %v577, %v573
    %v934 = vpack.c.b16 %v582, %v578
    %v935 = vpack.c.b16 %v583, %v579
    %v936 = vpack.c.b16 %v584, %v580
    %v937 = vpack.c.b16 %v585, %v581
    %v938 = vpack.c.b16 %v590, %v586
    %v939 = vpack.c.b16 %v591, %v587
    %v940 = vpack.c.b16 %v592, %v588
    %v941 = vpack.c.b16 %v593, %v589
    %v942 = vpack.c.b16 %v598, %v594
    %v943 = vpack.c.b16 %v599, %v595
    %v944 = vpack.c.b16 %v600, %v596
    %v945 = vpack.c.b16 %v601, %v597
    %v946 = vpack.c.b16 %v606, %v602
    %v947 = vpack.c.b16 %v607, %v603
    %v948 = vpack.c.b16 %v608, %v604
    %v949 = vpack.c.b16 %v609, %v605
    %v950 = vpack.c.b16 %v614, %v610
    %v951 = vpack.c.b16 %v615, %v611
    %v952 = vpack.c.b16 %v616, %v612
    %v953 = vpack.c.b16 %v617, %v613
    %v954 = vpack.c.b16 %v622, %v618
    %v955 = vpack.c.b16 %v623, %v619
    %v956 = vpack.c.b16 %v624, %v620
    %v957 = vpack.c.b16 %v625, %v621
    %v958 = vpack.c.b16 %v630, %v626
    %v959 = vpack.c.b16 %v631, %v627
    %v960 = vpack.c.b16 %v632, %v628
    %v961 = vpack.c.b16 %v633, %v629
    %v962 = vpack.c.b16 %v638, %v634
    %v963 = vpack.c.b16 %v639, %v635
    %v964 = vpack.c.b16 %v640, %v636
    %v965 = vpack.c.b16 %v641, %v637
    %v966 = vpack.c.b16 %v646, %v642
    %v967 = vpack.c.b16 %v647, %v643
    %v968 = vpack.c.b16 %v648, %v644
    %v969 = vpack.c.b16 %v649, %v645
    %v970 = vpack.c.b16 %v654, %v650
    %v971 = vpack.c.b16 %v655, %v651
    %v972 = vpack.c.b16 %v656, %v652
    %v973 = vpack.c.b16 %v657, %v653
    %v974 = vpack.c.b16 %v662, %v658
    %v975 = vpack.c.b16 %v663, %v659
    %v976 = vpack.c.b16 %v664, %v660
    %v977 = vpack.c.b16 %v665, %v661
    %v978 = vpack.c.b16 %v670, %v666
    %v979 = vpack.c.b16 %v671, %v667
    %v980 = vpack.c.b16 %v672, %v668
    %v981 = vpack.c.b16 %v673, %v669
    %v982 = vpack.c.b16 %v678, %v674
    %v983 = vpack.c.b16 %v679, %v675
    %v984 = vpack.c.b16 %v680, %v676
    %v985 = vpack.c.b16 %v681, %v677
    %v986 = vpack.c.b16 %v686, %v682
    %v987 = vpack.c.b16 %v687, %v683
    %v988 = vpack.c.b16 %v688, %v684
    %v989 = vpack.c.b16 %v689, %v685
    %v990 = vpack.c.b16 %v694, %v690
    %v991 = vpack.c.b16 %v695, %v691
    %v992 = vpack.c.b16 %v696, %v692
    %v993 = vpack.c.b16 %v697, %v693
    %v994 = vpack.c.b16 %v702, %v698
    %v995 = vpack.c.b16 %v703, %v699
    %v996 = vpack.c.b16 %v704, %v700
    %v997 = vpack.c.b16 %v705, %v701
    %v998 = vpack.c.b16 %v710, %v706
    %v999 = vpack.c.b16 %v711, %v707
    %v1000 = vpack.c.b16 %v712, %v708
    %v1001 = vpack.c.b16 %v713, %v709
    %v1002 = vpack.c.b16 %v718, %v714
    %v1003 = vpack.c.b16 %v719, %v715
    %v1004 = vpack.c.b16 %v720, %v716
    %v1005 = vpack.c.b16 %v721, %v717
    %v1006 = vpack.c.b16 %v726, %v722
    %v1007 = vpack.c.b16 %v727, %v723
    %v1008 = vpack.c.b16 %v728, %v724
    %v1009 = vpack.c.b16 %v729, %v725
    %v1010 = vpack.c.b16 %v734, %v730
    %v1011 = vpack.c.b16 %v735, %v731
    %v1012 = vpack.c.b16 %v736, %v732
    %v1013 = vpack.c.b16 %v737, %v733
    %v1014 = vpack.c.b16 %v742, %v738
    %v1015 = vpack.c.b16 %v743, %v739
    %v1016 = vpack.c.b16 %v744, %v740
    %v1017 = vpack.c.b16 %v745, %v741
    %v1018 = vpack.c.b16 %v750, %v746
    %v1019 = vpack.c.b16 %v751, %v747
    %v1020 = vpack.c.b16 %v752, %v748
    %v1021 = vpack.c.b16 %v753, %v749
    %v1022 = vpack.c.b16 %v758, %v754
    %v1023 = vpack.c.b16 %v759, %v755
    %v1024 = vpack.c.b16 %v760, %v756
    %v1025 = vpack.c.b16 %v761, %v757
    %v1026 = vpack.c.b16 %v766, %v762
    %v1027 = vpack.c.b16 %v767, %v763
    %v1028 = vpack.c.b16 %v768, %v764
    %v1029 = vpack.c.b16 %v769, %v765
    %v1030 = vpack.c.b16 %v774, %v770
    %v1031 = vpack.c.b16 %v775, %v771
    %v1032 = vpack.c.b16 %v776, %v772
    %v1033 = vpack.c.b16 %v777, %v773
    %v1034 = vpack.c.b16 %v782, %v778
    %v1035 = vpack.c.b16 %v783, %v779
    %v1036 = vpack.c.b16 %v784, %v780
    %v1037 = vpack.c.b16 %v785, %v781
    %v1038 = vpack.c.b16 %v790, %v786
    %v1039 = vpack.c.b16 %v791, %v787
    %v1040 = vpack.c.b16 %v792, %v788
    %v1041 = vpack.c.b16 %v793, %v789
    %v1042 = vpack.c.b16 %v798, %v794
    %v1043 = vpack.c.b16 %v799, %v795
    %v1044 = vpack.c.b16 %v800, %v796
    %v1045 = vpack.c.b16 %v801, %v797
    %v1046 = vpack.c.b16 %v806, %v802
    %v1047 = vpack.c.b16 %v807, %v803
    %v1048 = vpack.c.b16 %v808, %v804
    %v1049 = vpack.c.b16 %v809, %v805
    %v1050 = vpack.c.b16 %v814, %v810
    %v1051 = vpack.c.b16 %v815, %v811
    %v1052 = vpack.c.b16 %v816, %v812
    %v1053 = vpack.c.b16 %v817, %v813
    %v1054 = vpack.c.b16 %v822, %v818
    %v1055 = vpack.c.b16 %v823, %v819
    %v1056 = vpack.c.b16 %v824, %v820
    %v1057 = vpack.c.b16 %v825, %v821
    %v1058 = vpack.c.b16 %v830, %v826
    %v1059 = vpack.c.b16 %v831, %v827
    %v1060 = vpack.c.b16 %v832, %v828
    %v1061 = vpack.c.b16 %v833, %v829
    %v1062 = vpack.c.b16 %v838, %v834
    %v1063 = vpack.c.b16 %v839, %v835
    %v1064 = vpack.c.b16 %v840, %v836
    %v1065 = vpack.c.b16 %v841, %v837
    %v1066 = vpack.c.b16 %v846, %v842
    %v1067 = vpack.c.b16 %v847, %v843
    %v1068 = vpack.c.b16 %v848, %v844
    %v1069 = vpack.c.b16 %v849, %v845
    %v1070 = vpack.c.b16 %v854, %v850
    %v1071 = vpack.c.b16 %v855, %v851
    %v1072 = vpack.c.b16 %v856, %v852
    %v1073 = vpack.c.b16 %v857, %v853
    %v1074 = vpack.c.b16 %v862, %v858
    %v1075 = vpack.c.b16 %v863, %v859
    %v1076 = vpack.c.b16 %v864, %v860
    %v1077 = vpack.c.b16 %v865, %v861
    %v1078 = vpack.c.b16 %v870, %v866
    %v1079 = vpack.c.b16 %v871, %v867
    %v1080 = vpack.c.b16 %v872, %v868
    %v1081 = vpack.c.b16 %v873, %v869
    %v1082 = vpack.c.b16 %v878, %v874
    %v1083 = vpack.c.b16 %v879, %v875
    %v1084 = vpack.c.b16 %v880, %v876
    %v1085 = vpack.c.b16 %v881, %v877
    %v1086 = vpack.c.b16 %v886, %v882
    %v1087 = vpack.c.b16 %v887, %v883
    %v1088 = vpack.c.b16 %v888, %v884
    %v1089 = vpack.c.b16 %v889, %v885
    %v1090 = vpack.c.b16 %v894, %v890
    %v1091 = vpack.c.b16 %v895, %v891
    %v1092 = vpack.c.b16 %v896, %v892
    %v1093 = vpack.c.b16 %v897, %v893
    %v1094 = vpack.c.b16 %v902, %v898
    %v1095 = vpack.c.b16 %v903, %v899
    %v1096 = vpack.c.b16 %v904, %v900
    %v1097 = vpack.c.b16 %v905, %v901
    %1290 = vmatprep.subr.bf16.mxu0 %v935
    %1291 = vmatpush1.bf16.msra.mxu0 %v934
    %1292 = vmatprep.subr.bf16.mxu0 %v931
    %1293 = vmatpush1.bf16.msra.mxu0 %v930
    %1294 = vmatprep.subr.bf16.mxu0 %v927
    %1295 = vmatpush1.bf16.msra.mxu0 %v926
    %1296 = vmatprep.subr.bf16.mxu0 %v923
    %1297 = vmatpush1.bf16.msra.mxu0 %v922
    %1298 = vmatprep.subr.bf16.mxu0 %v919
    %1299 = vmatpush1.bf16.msra.mxu0 %v918
    %1300 = vmatprep.subr.bf16.mxu0 %v915
    %1301 = vmatpush1.bf16.msra.mxu0 %v914
    %1302 = vmatprep.subr.bf16.mxu0 %v911
    %1303 = vmatpush1.bf16.msra.mxu0 %v910
    %1304 = vmatprep.subr.bf16.mxu0 %v907
    %1305 = vmatpush1.bf16.msra.mxu0 %v906
    %1306 = vmatprep.subr.bf16.mxu0 %v967
    %1307 = vmatpush2.bf16.msra.mxu0 %v966
    %1308 = vmatprep.subr.bf16.mxu0 %v963
    %1309 = vmatpush2.bf16.msra.mxu0 %v962
    %1310 = vmatprep.subr.bf16.mxu0 %v959
    %1311 = vmatpush2.bf16.msra.mxu0 %v958
    %1312 = vmatprep.subr.bf16.mxu0 %v955
    %1313 = vmatpush2.bf16.msra.mxu0 %v954
    %1314 = vmatprep.subr.bf16.mxu0 %v951
    %1315 = vmatpush2.bf16.msra.mxu0 %v950
    %1316 = vmatprep.subr.bf16.mxu0 %v947
    %1317 = vmatpush2.bf16.msra.mxu0 %v946
    %1318 = vmatprep.subr.bf16.mxu0 %v943
    %1319 = vmatpush2.bf16.msra.mxu0 %v942
    %1320 = vmatprep.subr.bf16.mxu0 %v939
    %1321 = vmatpush2.bf16.msra.mxu0 %v938
    %1322 = vmatprep.mubr.bf16.mxu0 %v319
    %1323 = vmatmul.mubr.bf16.gmra.mxu0 %v318
    %v1324 = vpop.f32.mrf.mxu0
    %v1325 = vadd.f32 %v292, %v1324
    %v1326 = vpop.f32.mrf.mxu0
    %v1327 = vadd.f32 %v296, %v1326
    %v1328 = vpop.f32.mrf.mxu0
    %v1329 = vpop.f32.mrf.mxu0
    %1330 = vdwg.mxu0
    %1331 = vmatprep.subr.bf16.mxu0 %v999
    %1332 = vmatpush1.bf16.msra.mxu0 %v998
    %1333 = vmatprep.subr.bf16.mxu0 %v995
    %1334 = vmatpush1.bf16.msra.mxu0 %v994
    %1335 = vmatprep.subr.bf16.mxu0 %v991
    %1336 = vmatpush1.bf16.msra.mxu0 %v990
    %1337 = vmatprep.subr.bf16.mxu0 %v987
    %1338 = vmatpush1.bf16.msra.mxu0 %v986
    %1339 = vmatprep.subr.bf16.mxu0 %v983
    %1340 = vmatpush1.bf16.msra.mxu0 %v982
    %1341 = vmatprep.subr.bf16.mxu0 %v979
    %1342 = vmatpush1.bf16.msra.mxu0 %v978
    %1343 = vmatprep.subr.bf16.mxu0 %v975
    %1344 = vmatpush1.bf16.msra.mxu0 %v974
    %1345 = vmatprep.subr.bf16.mxu0 %v971
    %1346 = vmatpush1.bf16.msra.mxu0 %v970
    %1347 = vmatprep.subr.bf16.mxu0 %v1031
    %1348 = vmatpush2.bf16.msra.mxu0 %v1030
    %1349 = vmatprep.subr.bf16.mxu0 %v1027
    %1350 = vmatpush2.bf16.msra.mxu0 %v1026
    %1351 = vmatprep.subr.bf16.mxu0 %v1023
    %1352 = vmatpush2.bf16.msra.mxu0 %v1022
    %1353 = vmatprep.subr.bf16.mxu0 %v1019
    %1354 = vmatpush2.bf16.msra.mxu0 %v1018
    %1355 = vmatprep.subr.bf16.mxu0 %v1015
    %1356 = vmatpush2.bf16.msra.mxu0 %v1014
    %1357 = vmatprep.subr.bf16.mxu0 %v1011
    %1358 = vmatpush2.bf16.msra.mxu0 %v1010
    %1359 = vmatprep.subr.bf16.mxu0 %v1007
    %1360 = vmatpush2.bf16.msra.mxu0 %v1006
    %1361 = vmatprep.subr.bf16.mxu0 %v1003
    %1362 = vmatpush2.bf16.msra.mxu0 %v1002
    %1363 = vmatprep.mubr.bf16.mxu0 %v321
    %1364 = vmatmul.mubr.bf16.gmra.mxu0 %v320
    %v1365 = vpop.f32.mrf.mxu0
    %v1366 = vadd.f32 %v1325, %v1365
    %v1367 = vpop.f32.mrf.mxu0
    %v1368 = vadd.f32 %v1327, %v1367
    %v1369 = vpop.f32.mrf.mxu0
    %v1370 = vpop.f32.mrf.mxu0
    %1371 = vdwg.mxu0
    %1372 = vmatprep.subr.bf16.mxu0 %v1063
    %1373 = vmatpush1.bf16.msra.mxu0 %v1062
    %1374 = vmatprep.subr.bf16.mxu0 %v1059
    %1375 = vmatpush1.bf16.msra.mxu0 %v1058
    %1376 = vmatprep.subr.bf16.mxu0 %v1055
    %1377 = vmatpush1.bf16.msra.mxu0 %v1054
    %1378 = vmatprep.subr.bf16.mxu0 %v1051
    %1379 = vmatpush1.bf16.msra.mxu0 %v1050
    %1380 = vmatprep.subr.bf16.mxu0 %v1047
    %1381 = vmatpush1.bf16.msra.mxu0 %v1046
    %1382 = vmatprep.subr.bf16.mxu0 %v1043
    %1383 = vmatpush1.bf16.msra.mxu0 %v1042
    %1384 = vmatprep.subr.bf16.mxu0 %v1039
    %1385 = vmatpush1.bf16.msra.mxu0 %v1038
    %1386 = vmatprep.subr.bf16.mxu0 %v1035
    %1387 = vmatpush1.bf16.msra.mxu0 %v1034
    %1388 = vmatprep.subr.bf16.mxu0 %v1095
    %1389 = vmatpush2.bf16.msra.mxu0 %v1094
    %1390 = vmatprep.subr.bf16.mxu0 %v1091
    %1391 = vmatpush2.bf16.msra.mxu0 %v1090
    %1392 = vmatprep.subr.bf16.mxu0 %v1087
    %1393 = vmatpush2.bf16.msra.mxu0 %v1086
    %1394 = vmatprep.subr.bf16.mxu0 %v1083
    %1395 = vmatpush2.bf16.msra.mxu0 %v1082
    %1396 = vmatprep.subr.bf16.mxu0 %v1079
    %1397 = vmatpush2.bf16.msra.mxu0 %v1078
    %1398 = vmatprep.subr.bf16.mxu0 %v1075
    %1399 = vmatpush2.bf16.msra.mxu0 %v1074
    %1400 = vmatprep.subr.bf16.mxu0 %v1071
    %1401 = vmatpush2.bf16.msra.mxu0 %v1070
    %1402 = vmatprep.subr.bf16.mxu0 %v1067
    %1403 = vmatpush2.bf16.msra.mxu0 %v1066
    %1404 = vmatprep.mubr.bf16.mxu0 %v323
    %1405 = vmatmul.mubr.bf16.gmra.mxu0 %v322
    %v1406 = vpop.f32.mrf.mxu0
    %v1407 = vadd.f32 %v1366, %v1406
    %v1408 = vpop.f32.mrf.mxu0
    %v1409 = vadd.f32 %v1368, %v1408
    %v1410 = vpop.f32.mrf.mxu0
    %v1411 = vpop.f32.mrf.mxu0
    %1412 = vdwg.mxu0
    %1413 = vmatprep.subr.bf16.mxu0 %v937
    %1414 = vmatpush1.bf16.msra.mxu0 %v936
    %1415 = vmatprep.subr.bf16.mxu0 %v933
    %1416 = vmatpush1.bf16.msra.mxu0 %v932
    %1417 = vmatprep.subr.bf16.mxu0 %v929
    %1418 = vmatpush1.bf16.msra.mxu0 %v928
    %1419 = vmatprep.subr.bf16.mxu0 %v925
    %1420 = vmatpush1.bf16.msra.mxu0 %v924
    %1421 = vmatprep.subr.bf16.mxu0 %v921
    %1422 = vmatpush1.bf16.msra.mxu0 %v920
    %1423 = vmatprep.subr.bf16.mxu0 %v917
    %1424 = vmatpush1.bf16.msra.mxu0 %v916
    %1425 = vmatprep.subr.bf16.mxu0 %v913
    %1426 = vmatpush1.bf16.msra.mxu0 %v912
    %1427 = vmatprep.subr.bf16.mxu0 %v909
    %1428 = vmatpush1.bf16.msra.mxu0 %v908
    %1429 = vmatprep.subr.bf16.mxu0 %v969
    %1430 = vmatpush2.bf16.msra.mxu0 %v968
    %1431 = vmatprep.subr.bf16.mxu0 %v965
    %1432 = vmatpush2.bf16.msra.mxu0 %v964
    %1433 = vmatprep.subr.bf16.mxu0 %v961
    %1434 = vmatpush2.bf16.msra.mxu0 %v960
    %1435 = vmatprep.subr.bf16.mxu0 %v957
    %1436 = vmatpush2.bf16.msra.mxu0 %v956
    %1437 = vmatprep.subr.bf16.mxu0 %v953
    %1438 = vmatpush2.bf16.msra.mxu0 %v952
    %1439 = vmatprep.subr.bf16.mxu0 %v949
    %1440 = vmatpush2.bf16.msra.mxu0 %v948
    %1441 = vmatprep.subr.bf16.mxu0 %v945
    %1442 = vmatpush2.bf16.msra.mxu0 %v944
    %1443 = vmatprep.subr.bf16.mxu0 %v941
    %1444 = vmatpush2.bf16.msra.mxu0 %v940
    %1445 = vmatprep.mubr.bf16.mxu0 %v319
    %1446 = vmatmul.mubr.bf16.gmra.mxu0 %v318
    %v1447 = vpop.f32.mrf.mxu0
    %v1448 = vadd.f32 %v300, %v1447
    %v1449 = vpop.f32.mrf.mxu0
    %v1450 = vadd.f32 %v304, %v1449
    %v1451 = vpop.f32.mrf.mxu0
    %v1452 = vpop.f32.mrf.mxu0
    %1453 = vdwg.mxu0
    %1454 = vmatprep.subr.bf16.mxu0 %v1001
    %1455 = vmatpush1.bf16.msra.mxu0 %v1000
    %1456 = vmatprep.subr.bf16.mxu0 %v997
    %1457 = vmatpush1.bf16.msra.mxu0 %v996
    %1458 = vmatprep.subr.bf16.mxu0 %v993
    %1459 = vmatpush1.bf16.msra.mxu0 %v992
    %1460 = vmatprep.subr.bf16.mxu0 %v989
    %1461 = vmatpush1.bf16.msra.mxu0 %v988
    %1462 = vmatprep.subr.bf16.mxu0 %v985
    %1463 = vmatpush1.bf16.msra.mxu0 %v984
    %1464 = vmatprep.subr.bf16.mxu0 %v981
    %1465 = vmatpush1.bf16.msra.mxu0 %v980
    %1466 = vmatprep.subr.bf16.mxu0 %v977
    %1467 = vmatpush1.bf16.msra.mxu0 %v976
    %1468 = vmatprep.subr.bf16.mxu0 %v973
    %1469 = vmatpush1.bf16.msra.mxu0 %v972
    %1470 = vmatprep.subr.bf16.mxu0 %v1033
    %1471 = vmatpush2.bf16.msra.mxu0 %v1032
    %1472 = vmatprep.subr.bf16.mxu0 %v1029
    %1473 = vmatpush2.bf16.msra.mxu0 %v1028
    %1474 = vmatprep.subr.bf16.mxu0 %v1025
    %1475 = vmatpush2.bf16.msra.mxu0 %v1024
    %1476 = vmatprep.subr.bf16.mxu0 %v1021
    %1477 = vmatpush2.bf16.msra.mxu0 %v1020
    %1478 = vmatprep.subr.bf16.mxu0 %v1017
    %1479 = vmatpush2.bf16.msra.mxu0 %v1016
    %1480 = vmatprep.subr.bf16.mxu0 %v1013
    %1481 = vmatpush2.bf16.msra.mxu0 %v1012
    %1482 = vmatprep.subr.bf16.mxu0 %v1009
    %1483 = vmatpush2.bf16.msra.mxu0 %v1008
    %1484 = vmatprep.subr.bf16.mxu0 %v1005
    %1485 = vmatpush2.bf16.msra.mxu0 %v1004
    %1486 = vmatprep.mubr.bf16.mxu0 %v321
    %1487 = vmatmul.mubr.bf16.gmra.mxu0 %v320
    %v1488 = vpop.f32.mrf.mxu0
    %v1489 = vadd.f32 %v1448, %v1488
    %v1490 = vpop.f32.mrf.mxu0
    %v1491 = vadd.f32 %v1450, %v1490
    %v1492 = vpop.f32.mrf.mxu0
    %v1493 = vpop.f32.mrf.mxu0
    %1494 = vdwg.mxu0
    %1495 = vmatprep.subr.bf16.mxu0 %v1065
    %1496 = vmatpush1.bf16.msra.mxu0 %v1064
    %1497 = vmatprep.subr.bf16.mxu0 %v1061
    %1498 = vmatpush1.bf16.msra.mxu0 %v1060
    %1499 = vmatprep.subr.bf16.mxu0 %v1057
    %1500 = vmatpush1.bf16.msra.mxu0 %v1056
    %1501 = vmatprep.subr.bf16.mxu0 %v1053
    %1502 = vmatpush1.bf16.msra.mxu0 %v1052
    %1503 = vmatprep.subr.bf16.mxu0 %v1049
    %1504 = vmatpush1.bf16.msra.mxu0 %v1048
    %1505 = vmatprep.subr.bf16.mxu0 %v1045
    %1506 = vmatpush1.bf16.msra.mxu0 %v1044
    %1507 = vmatprep.subr.bf16.mxu0 %v1041
    %1508 = vmatpush1.bf16.msra.mxu0 %v1040
    %1509 = vmatprep.subr.bf16.mxu0 %v1037
    %1510 = vmatpush1.bf16.msra.mxu0 %v1036
    %1511 = vmatprep.subr.bf16.mxu0 %v1097
    %1512 = vmatpush2.bf16.msra.mxu0 %v1096
    %1513 = vmatprep.subr.bf16.mxu0 %v1093
    %1514 = vmatpush2.bf16.msra.mxu0 %v1092
    %1515 = vmatprep.subr.bf16.mxu0 %v1089
    %1516 = vmatpush2.bf16.msra.mxu0 %v1088
    %1517 = vmatprep.subr.bf16.mxu0 %v1085
    %1518 = vmatpush2.bf16.msra.mxu0 %v1084
    %1519 = vmatprep.subr.bf16.mxu0 %v1081
    %1520 = vmatpush2.bf16.msra.mxu0 %v1080
    %1521 = vmatprep.subr.bf16.mxu0 %v1077
    %1522 = vmatpush2.bf16.msra.mxu0 %v1076
    %1523 = vmatprep.subr.bf16.mxu0 %v1073
    %1524 = vmatpush2.bf16.msra.mxu0 %v1072
    %1525 = vmatprep.subr.bf16.mxu0 %v1069
    %1526 = vmatpush2.bf16.msra.mxu0 %v1068
    %1527 = vmatprep.mubr.bf16.mxu0 %v323
    %1528 = vmatmul.mubr.bf16.gmra.mxu0 %v322
    %v1529 = vpop.f32.mrf.mxu0
    %v1530 = vadd.f32 %v1489, %v1529
    %v1531 = vpop.f32.mrf.mxu0
    %v1532 = vadd.f32 %v1491, %v1531
    %v1533 = vpop.f32.mrf.mxu0
    %v1534 = vpop.f32.mrf.mxu0
    %1535 = vdwg.mxu0
    %v1536 = vmax.f32 %v1407, 0.0
    %v1537 = vmax.f32 %v1409, 0.0
    %v1538 = vmax.f32 %v1530, 0.0
    %v1539 = vmax.f32 %v1532, 0.0
    %v1540 = vpack.c.bf16 %v1536, %v1536
    %v1541 = vpack.c.bf16 %v1537, %v1537
    %v1542 = vpack.c.bf16 %v1538, %v1538
    %v1543 = vpack.c.bf16 %v1539, %v1539
    %v1544 = vld [vmem:[#allocation8] sm:$0xf]
    %v1545 = vld [vmem:[#allocation8 + $0x4] sm:$0xf]
    %v1546 = vld [vmem:[#allocation8 + $0x8] sm:$0xf]
    %v1547 = vld [vmem:[#allocation8 + $0xc] sm:$0xf]
    %v1548 = vld [vmem:[#allocation8 + $0x10] sm:$0xf]
    %v1549 = vld [vmem:[#allocation8 + $0x14] sm:$0xf]
    %v1550 = vld [vmem:[#allocation8 + $0x18] sm:$0xf]
    %v1551 = vld [vmem:[#allocation8 + $0x1c] sm:$0xf]
    %v1552 = vld [vmem:[#allocation8 + $0x20] sm:$0xf]
    %v1553 = vld [vmem:[#allocation8 + $0x24] sm:$0xf]
    %v1554 = vld [vmem:[#allocation8 + $0x28] sm:$0xf]
    %v1555 = vld [vmem:[#allocation8 + $0x2c] sm:$0xf]
    %v1556 = vld [vmem:[#allocation8 + $0x30] sm:$0xf]
    %v1557 = vld [vmem:[#allocation8 + $0x34] sm:$0xf]
    %v1558 = vld [vmem:[#allocation8 + $0x38] sm:$0xf]
    %v1559 = vld [vmem:[#allocation8 + $0x3c] sm:$0xf]
    %v1560 = vld [vmem:[#allocation8 + $0x40] sm:$0xf]
    %v1561 = vld [vmem:[#allocation8 + $0x44] sm:$0xf]
    %v1562 = vld [vmem:[#allocation8 + $0x48] sm:$0xf]
    %v1563 = vld [vmem:[#allocation8 + $0x4c] sm:$0xf]
    %v1564 = vld [vmem:[#allocation8 + $0x50] sm:$0xf]
    %v1565 = vld [vmem:[#allocation8 + $0x54] sm:$0xf]
    %v1566 = vld [vmem:[#allocation8 + $0x58] sm:$0xf]
    %v1567 = vld [vmem:[#allocation8 + $0x5c] sm:$0xf]
    %v1568 = vld [vmem:[#allocation8 + $0x60] sm:$0xf]
    %v1569 = vld [vmem:[#allocation8 + $0x64] sm:$0xf]
    %v1570 = vld [vmem:[#allocation8 + $0x68] sm:$0xf]
    %v1571 = vld [vmem:[#allocation8 + $0x6c] sm:$0xf]
    %v1572 = vld [vmem:[#allocation8 + $0x70] sm:$0xf]
    %v1573 = vld [vmem:[#allocation8 + $0x74] sm:$0xf]
    %v1574 = vld [vmem:[#allocation8 + $0x78] sm:$0xf]
    %v1575 = vld [vmem:[#allocation8 + $0x7c] sm:$0xf]
    %v1576 = vld [vmem:[#allocation8 + $0x80] sm:$0xf]
    %v1577 = vld [vmem:[#allocation8 + $0x84] sm:$0xf]
    %v1578 = vld [vmem:[#allocation8 + $0x88] sm:$0xf]
    %v1579 = vld [vmem:[#allocation8 + $0x8c] sm:$0xf]
    %v1580 = vld [vmem:[#allocation8 + $0x90] sm:$0xf]
    %v1581 = vld [vmem:[#allocation8 + $0x94] sm:$0xf]
    %v1582 = vld [vmem:[#allocation8 + $0x98] sm:$0xf]
    %v1583 = vld [vmem:[#allocation8 + $0x9c] sm:$0xf]
    %v1584 = vld [vmem:[#allocation8 + $0xa0] sm:$0xf]
    %v1585 = vld [vmem:[#allocation8 + $0xa4] sm:$0xf]
    %v1586 = vld [vmem:[#allocation8 + $0xa8] sm:$0xf]
    %v1587 = vld [vmem:[#allocation8 + $0xac] sm:$0xf]
    %v1588 = vld [vmem:[#allocation8 + $0xb0] sm:$0xf]
    %v1589 = vld [vmem:[#allocation8 + $0xb4] sm:$0xf]
    %v1590 = vld [vmem:[#allocation8 + $0xb8] sm:$0xf]
    %v1591 = vld [vmem:[#allocation8 + $0xbc] sm:$0xf]
    %v1592 = vld [vmem:[#allocation8 + $0xc0] sm:$0xf]
    %v1593 = vld [vmem:[#allocation8 + $0xc4] sm:$0xf]
    %v1594 = vld [vmem:[#allocation8 + $0xc8] sm:$0xf]
    %v1595 = vld [vmem:[#allocation8 + $0xcc] sm:$0xf]
    %v1596 = vld [vmem:[#allocation8 + $0xd0] sm:$0xf]
    %v1597 = vld [vmem:[#allocation8 + $0xd4] sm:$0xf]
    %v1598 = vld [vmem:[#allocation8 + $0xd8] sm:$0xf]
    %v1599 = vld [vmem:[#allocation8 + $0xdc] sm:$0xf]
    %v1600 = vld [vmem:[#allocation8 + $0xe0] sm:$0xf]
    %v1601 = vld [vmem:[#allocation8 + $0xe4] sm:$0xf]
    %v1602 = vld [vmem:[#allocation8 + $0xe8] sm:$0xf]
    %v1603 = vld [vmem:[#allocation8 + $0xec] sm:$0xf]
    %v1604 = vld [vmem:[#allocation8 + $0xf0] sm:$0xf]
    %v1605 = vld [vmem:[#allocation8 + $0xf4] sm:$0xf]
    %v1606 = vld [vmem:[#allocation8 + $0xf8] sm:$0xf]
    %v1607 = vld [vmem:[#allocation8 + $0xfc] sm:$0xf]
    %v1608 = vld [vmem:[%s4] sm:$0x1]
    %v1610 = vlaneseq
    %v1611 = vshrl.u32 %v1610, 7
    %v1612 = vsub.s32 0, %v1611
    %v1613 = vrot.slane %v1608, %v1612
    %v1679 = vunpack.c.l.b16 %v1544
    %v1680 = vunpack.c.l.b16 %v1545
    %v1681 = vunpack.c.l.b16 %v1546
    %v1682 = vunpack.c.l.b16 %v1547
    %v1683 = vunpack.c.l.b16 %v1548
    %v1684 = vunpack.c.l.b16 %v1549
    %v1685 = vunpack.c.l.b16 %v1550
    %v1686 = vunpack.c.l.b16 %v1551
    %v1687 = vunpack.c.l.b16 %v1552
    %v1688 = vunpack.c.l.b16 %v1553
    %v1689 = vunpack.c.l.b16 %v1554
    %v1690 = vunpack.c.l.b16 %v1555
    %v1691 = vunpack.c.l.b16 %v1556
    %v1692 = vunpack.c.l.b16 %v1557
    %v1693 = vunpack.c.l.b16 %v1558
    %v1694 = vunpack.c.l.b16 %v1559
    %v1695 = vunpack.c.l.b16 %v1560
    %v1696 = vunpack.c.l.b16 %v1561
    %v1697 = vunpack.c.l.b16 %v1562
    %v1698 = vunpack.c.l.b16 %v1563
    %v1699 = vunpack.c.l.b16 %v1564
    %v1700 = vunpack.c.l.b16 %v1565
    %v1701 = vunpack.c.l.b16 %v1566
    %v1702 = vunpack.c.l.b16 %v1567
    %v1703 = vunpack.c.l.b16 %v1568
    %v1704 = vunpack.c.l.b16 %v1569
    %v1705 = vunpack.c.l.b16 %v1570
    %v1706 = vunpack.c.l.b16 %v1571
    %v1707 = vunpack.c.l.b16 %v1572
    %v1708 = vunpack.c.l.b16 %v1573
    %v1709 = vunpack.c.l.b16 %v1574
    %v1710 = vunpack.c.l.b16 %v1575
    %v1711 = vunpack.c.l.b16 %v1576
    %v1712 = vunpack.c.l.b16 %v1577
    %v1713 = vunpack.c.l.b16 %v1578
    %v1714 = vunpack.c.l.b16 %v1579
    %v1715 = vunpack.c.l.b16 %v1580
    %v1716 = vunpack.c.l.b16 %v1581
    %v1717 = vunpack.c.l.b16 %v1582
    %v1718 = vunpack.c.l.b16 %v1583
    %v1719 = vunpack.c.l.b16 %v1584
    %v1720 = vunpack.c.l.b16 %v1585
    %v1721 = vunpack.c.l.b16 %v1586
    %v1722 = vunpack.c.l.b16 %v1587
    %v1723 = vunpack.c.l.b16 %v1588
    %v1724 = vunpack.c.l.b16 %v1589
    %v1725 = vunpack.c.l.b16 %v1590
    %v1726 = vunpack.c.l.b16 %v1591
    %v1727 = vunpack.c.l.b16 %v1592
    %v1728 = vunpack.c.l.b16 %v1593
    %v1729 = vunpack.c.l.b16 %v1594
    %v1730 = vunpack.c.l.b16 %v1595
    %v1731 = vunpack.c.l.b16 %v1596
    %v1732 = vunpack.c.l.b16 %v1597
    %v1733 = vunpack.c.l.b16 %v1598
    %v1734 = vunpack.c.l.b16 %v1599
    %v1735 = vunpack.c.l.b16 %v1600
    %v1736 = vunpack.c.l.b16 %v1601
    %v1737 = vunpack.c.l.b16 %v1602
    %v1738 = vunpack.c.l.b16 %v1603
    %v1739 = vunpack.c.l.b16 %v1604
    %v1740 = vunpack.c.l.b16 %v1605
    %v1741 = vunpack.c.l.b16 %v1606
    %v1742 = vunpack.c.l.b16 %v1607
    %v1743 = vpack.c.b16 %v1680, %v1679
    %v1744 = vpack.c.b16 %v1682, %v1681
    %v1745 = vpack.c.b16 %v1684, %v1683
    %v1746 = vpack.c.b16 %v1686, %v1685
    %v1747 = vpack.c.b16 %v1688, %v1687
    %v1748 = vpack.c.b16 %v1690, %v1689
    %v1749 = vpack.c.b16 %v1692, %v1691
    %v1750 = vpack.c.b16 %v1694, %v1693
    %v1751 = vpack.c.b16 %v1696, %v1695
    %v1752 = vpack.c.b16 %v1698, %v1697
    %v1753 = vpack.c.b16 %v1700, %v1699
    %v1754 = vpack.c.b16 %v1702, %v1701
    %v1755 = vpack.c.b16 %v1704, %v1703
    %v1756 = vpack.c.b16 %v1706, %v1705
    %v1757 = vpack.c.b16 %v1708, %v1707
    %v1758 = vpack.c.b16 %v1710, %v1709
    %v1759 = vpack.c.b16 %v1712, %v1711
    %v1760 = vpack.c.b16 %v1714, %v1713
    %v1761 = vpack.c.b16 %v1716, %v1715
    %v1762 = vpack.c.b16 %v1718, %v1717
    %v1763 = vpack.c.b16 %v1720, %v1719
    %v1764 = vpack.c.b16 %v1722, %v1721
    %v1765 = vpack.c.b16 %v1724, %v1723
    %v1766 = vpack.c.b16 %v1726, %v1725
    %v1767 = vpack.c.b16 %v1728, %v1727
    %v1768 = vpack.c.b16 %v1730, %v1729
    %v1769 = vpack.c.b16 %v1732, %v1731
    %v1770 = vpack.c.b16 %v1734, %v1733
    %v1771 = vpack.c.b16 %v1736, %v1735
    %v1772 = vpack.c.b16 %v1738, %v1737
    %v1773 = vpack.c.b16 %v1740, %v1739
    %v1774 = vpack.c.b16 %v1742, %v1741
    %1807 = vmatprep.subr.bf16.mxu0 0
    %1808 = vmatpush1.bf16.msra.mxu0 %v1750
    %1809 = vmatprep.subr.bf16.mxu0 0
    %1810 = vmatpush1.bf16.msra.mxu0 %v1749
    %1811 = vmatprep.subr.bf16.mxu0 0
    %1812 = vmatpush1.bf16.msra.mxu0 %v1748
    %1813 = vmatprep.subr.bf16.mxu0 0
    %1814 = vmatpush1.bf16.msra.mxu0 %v1747
    %1815 = vmatprep.subr.bf16.mxu0 0
    %1816 = vmatpush1.bf16.msra.mxu0 %v1746
    %1817 = vmatprep.subr.bf16.mxu0 0
    %1818 = vmatpush1.bf16.msra.mxu0 %v1745
    %1819 = vmatprep.subr.bf16.mxu0 0
    %1820 = vmatpush1.bf16.msra.mxu0 %v1744
    %1821 = vmatprep.subr.bf16.mxu0 0
    %1822 = vmatpush1.bf16.msra.mxu0 %v1743
    %1823 = vmatprep.subr.bf16.mxu0 0
    %1824 = vmatpush2.bf16.msra.mxu0 %v1758
    %1825 = vmatprep.subr.bf16.mxu0 0
    %1826 = vmatpush2.bf16.msra.mxu0 %v1757
    %1827 = vmatprep.subr.bf16.mxu0 0
    %1828 = vmatpush2.bf16.msra.mxu0 %v1756
    %1829 = vmatprep.subr.bf16.mxu0 0
    %1830 = vmatpush2.bf16.msra.mxu0 %v1755
    %1831 = vmatprep.subr.bf16.mxu0 0
    %1832 = vmatpush2.bf16.msra.mxu0 %v1754
    %1833 = vmatprep.subr.bf16.mxu0 0
    %1834 = vmatpush2.bf16.msra.mxu0 %v1753
    %1835 = vmatprep.subr.bf16.mxu0 0
    %1836 = vmatpush2.bf16.msra.mxu0 %v1752
    %1837 = vmatprep.subr.bf16.mxu0 0
    %1838 = vmatpush2.bf16.msra.mxu0 %v1751
    %1839 = vmatprep.mubr.bf16.mxu0 %v1541
    %1840 = vmatmul.mubr.bf16.gmra.mxu0 %v1540
    %v1841 = vpop.f32.mrf.mxu0
    %v1842 = vadd.f32 %v1613, %v1841
    %v1843 = vpop.f32.mrf.mxu0
    %v1844 = vpop.f32.mrf.mxu0
    %v1845 = vpop.f32.mrf.mxu0
    %1846 = vdwg.mxu0
    %1847 = vmatprep.subr.bf16.mxu0 0
    %1848 = vmatpush1.bf16.msra.mxu0 %v1766
    %1849 = vmatprep.subr.bf16.mxu0 0
    %1850 = vmatpush1.bf16.msra.mxu0 %v1765
    %1851 = vmatprep.subr.bf16.mxu0 0
    %1852 = vmatpush1.bf16.msra.mxu0 %v1764
    %1853 = vmatprep.subr.bf16.mxu0 0
    %1854 = vmatpush1.bf16.msra.mxu0 %v1763
    %1855 = vmatprep.subr.bf16.mxu0 0
    %1856 = vmatpush1.bf16.msra.mxu0 %v1762
    %1857 = vmatprep.subr.bf16.mxu0 0
    %1858 = vmatpush1.bf16.msra.mxu0 %v1761
    %1859 = vmatprep.subr.bf16.mxu0 0
    %1860 = vmatpush1.bf16.msra.mxu0 %v1760
    %1861 = vmatprep.subr.bf16.mxu0 0
    %1862 = vmatpush1.bf16.msra.mxu0 %v1759
    %1863 = vmatprep.subr.bf16.mxu0 0
    %1864 = vmatpush2.bf16.msra.mxu0 %v1774
    %1865 = vmatprep.subr.bf16.mxu0 0
    %1866 = vmatpush2.bf16.msra.mxu0 %v1773
    %1867 = vmatprep.subr.bf16.mxu0 0
    %1868 = vmatpush2.bf16.msra.mxu0 %v1772
    %1869 = vmatprep.subr.bf16.mxu0 0
    %1870 = vmatpush2.bf16.msra.mxu0 %v1771
    %1871 = vmatprep.subr.bf16.mxu0 0
    %1872 = vmatpush2.bf16.msra.mxu0 %v1770
    %1873 = vmatprep.subr.bf16.mxu0 0
    %1874 = vmatpush2.bf16.msra.mxu0 %v1769
    %1875 = vmatprep.subr.bf16.mxu0 0
    %1876 = vmatpush2.bf16.msra.mxu0 %v1768
    %1877 = vmatprep.subr.bf16.mxu0 0
    %1878 = vmatpush2.bf16.msra.mxu0 %v1767
    %1879 = vmatprep.mubr.bf16.mxu0 %v1543
    %1880 = vmatmul.mubr.bf16.gmra.mxu0 %v1542
    %v1881 = vpop.f32.mrf.mxu0
    %v1882 = vadd.f32 %v1842, %v1881
    %v1883 = vpop.f32.mrf.mxu0
    %v1884 = vpop.f32.mrf.mxu0
    %v1885 = vpop.f32.mrf.mxu0
    %1886 = vdwg.mxu0
    %v1887 = vmax.f32 %v1882, 0.0
    %v1888 = vpack.c.bf16 %v1887, %v1887
    %v1889 = vld [vmem:[#allocation10] sm:$0xf]
    %v1890 = vld [vmem:[#allocation10 + $0x4] sm:$0xf]
    %v1891 = vld [vmem:[#allocation10 + $0x8] sm:$0xf]
    %v1892 = vld [vmem:[#allocation10 + $0xc] sm:$0xf]
    %v1893 = vld [vmem:[#allocation10 + $0x10] sm:$0xf]
    %v1894 = vld [vmem:[#allocation10 + $0x14] sm:$0xf]
    %v1895 = vld [vmem:[#allocation10 + $0x18] sm:$0xf]
    %v1896 = vld [vmem:[#allocation10 + $0x1c] sm:$0xf]
    %v1897 = vld [vmem:[#allocation10 + $0x20] sm:$0xf]
    %v1898 = vld [vmem:[#allocation10 + $0x24] sm:$0xf]
    %v1899 = vld [vmem:[#allocation10 + $0x28] sm:$0xf]
    %v1900 = vld [vmem:[#allocation10 + $0x2c] sm:$0xf]
    %v1901 = vld [vmem:[#allocation10 + $0x30] sm:$0xf]
    %v1902 = vld [vmem:[#allocation10 + $0x34] sm:$0xf]
    %v1903 = vld [vmem:[#allocation10 + $0x38] sm:$0xf]
    %v1904 = vld [vmem:[#allocation10 + $0x3c] sm:$0xf]
    %v1905 = vld [vmem:[%s6] sm:$0x1]
    %v1907 = vlaneseq
    %v1908 = vshrl.u32 %v1907, 7
    %v1909 = vsub.s32 0, %v1908
    %v1910 = vrot.slane %v1905, %v1909
    %v1928 = vunpack.c.l.b16 %v1889
    %v1929 = vunpack.c.l.b16 %v1890
    %v1930 = vunpack.c.l.b16 %v1891
    %v1931 = vunpack.c.l.b16 %v1892
    %v1932 = vunpack.c.l.b16 %v1893
    %v1933 = vunpack.c.l.b16 %v1894
    %v1934 = vunpack.c.l.b16 %v1895
    %v1935 = vunpack.c.l.b16 %v1896
    %v1936 = vunpack.c.l.b16 %v1897
    %v1937 = vunpack.c.l.b16 %v1898
    %v1938 = vunpack.c.l.b16 %v1899
    %v1939 = vunpack.c.l.b16 %v1900
    %v1940 = vunpack.c.l.b16 %v1901
    %v1941 = vunpack.c.l.b16 %v1902
    %v1942 = vunpack.c.l.b16 %v1903
    %v1943 = vunpack.c.l.b16 %v1904
    %v1944 = vpack.c.b16 %v1929, %v1928
    %v1945 = vpack.c.b16 %v1931, %v1930
    %v1946 = vpack.c.b16 %v1933, %v1932
    %v1947 = vpack.c.b16 %v1935, %v1934
    %v1948 = vpack.c.b16 %v1937, %v1936
    %v1949 = vpack.c.b16 %v1939, %v1938
    %v1950 = vpack.c.b16 %v1941, %v1940
    %v1951 = vpack.c.b16 %v1943, %v1942
    %1960 = vmatprep.subr.bf16.mxu0 0
    %1961 = vmatpush1.bf16.msra.mxu0 %v1951
    %1962 = vmatprep.subr.bf16.mxu0 0
    %1963 = vmatpush1.bf16.msra.mxu0 %v1950
    %1964 = vmatprep.subr.bf16.mxu0 0
    %1965 = vmatpush1.bf16.msra.mxu0 %v1949
    %1966 = vmatprep.subr.bf16.mxu0 0
    %1967 = vmatpush1.bf16.msra.mxu0 %v1948
    %1968 = vmatprep.subr.bf16.mxu0 0
    %1969 = vmatpush1.bf16.msra.mxu0 %v1947
    %1970 = vmatprep.subr.bf16.mxu0 0
    %1971 = vmatpush1.bf16.msra.mxu0 %v1946
    %1972 = vmatprep.subr.bf16.mxu0 0
    %1973 = vmatpush1.bf16.msra.mxu0 %v1945
    %1974 = vmatprep.subr.bf16.mxu0 0
    %1975 = vmatpush1.bf16.msra.mxu0 %v1944
    %1976 = vmatprep.subr.bf16.mxu0 0
    %1977 = vmatpush2.bf16.msra.mxu0 0
    %1978 = vmatprep.subr.bf16.mxu0 0
    %1979 = vmatpush2.bf16.msra.mxu0 0
    %1980 = vmatprep.subr.bf16.mxu0 0
    %1981 = vmatpush2.bf16.msra.mxu0 0
    %1982 = vmatprep.subr.bf16.mxu0 0
    %1983 = vmatpush2.bf16.msra.mxu0 0
    %1984 = vmatprep.subr.bf16.mxu0 0
    %1985 = vmatpush2.bf16.msra.mxu0 0
    %1986 = vmatprep.subr.bf16.mxu0 0
    %1987 = vmatpush2.bf16.msra.mxu0 0
    %1988 = vmatprep.subr.bf16.mxu0 0
    %1989 = vmatpush2.bf16.msra.mxu0 0
    %1990 = vmatprep.subr.bf16.mxu0 0
    %1991 = vmatpush2.bf16.msra.mxu0 0
    %1992 = vmatprep.mubr.bf16.mxu0 0
    %1993 = vmatmul.mubr.bf16.gmra.mxu0 %v1888
    %v1994 = vpop.f32.mrf.mxu0
    %v1995 = vadd.f32 %v1910, %v1994
    %v1996 = vpop.f32.mrf.mxu0
    %v1997 = vpop.f32.mrf.mxu0
    %v1998 = vpop.f32.mrf.mxu0
    %1999 = vdwg.mxu0
    %2000 = vst [vmem:[#allocation11] sm:$0xff] %v1995
    // Predicated region
    $region50: #{tpu_custom_call.1} parent=1 // pred_check
      _
    $region51: #{tpu_custom_call.1} parent=1 // pred_check_branch
      %2002 = sbr.rel (0) target = $region53
    $region52: #{tpu_custom_call.1} parent=1 // pred_region
      %s2004 = ssub.s32 128, 128
      %2005 = vsyncadd [#allocation4], %s2004
      %s2007 = sshll.u32 [#allocation11], 4
      %s2008 = int_to_ptr.vmem [resolvable:$true] %s2007
      %2010 = dma.vmem_to_hbm [thread:$0]  %s2008, 128, %s7, [#allocation4]
    $region53: #{tpu_custom_call.1} parent=1 // pred_fallthru
      _
    // Predicated region
    $region54: #{tpu_custom_call.1} parent=1 // pred_check
      _
    $region55: #{tpu_custom_call.1} parent=1 // pred_check_branch
      %2012 = sbr.rel (0) target = $region57
    $region56: #{tpu_custom_call.1} parent=1 // pred_region
      %2013 = dma.done [#allocation4], 128
    $region57: #{tpu_custom_call.1} parent=1 // pred_fallthru
      _
    %2014 = vsyncpa [#allocation3], 1
    %2015 = vsyncpa [#allocation6], 1
    %2016 = vsyncpa [#allocation9], 1
    %2017 = vsyncpa [#allocation4], 1

</llo_original>
